<compile_context>
chip_gen: v5e
topology: v5e:2x2
jax: 0.10.0
libtpu: 0.0.40
codegen_flags: <defaults>
</compile_context>

<pallas_src>
import functools

import jax
import jax.numpy as jnp
from jax.experimental import pallas as pl
from jax.experimental.pallas import tpu as pltpu

# ----------------------------- config ---------------------------------
VOCAB = 100        # real model: 30522
MAX_POS = 16       # real model: 512
DIM = 64           # real model: 768
N_HEADS = 4        # real model: 12
HEAD_DIM = DIM // N_HEADS
FFN_DIM = 128      # real model: 3072
N_LAYERS = 2       # real model: 6
N_CLASSES = 4
CLS_PAD = 128      # lane-dense padded classifier output width
LN_EPS = 1e-12
NEG_INF = -1e9


def _vmem():
    return pl.BlockSpec(memory_space=pltpu.MemorySpace.VMEM)


def _layernorm(x, g, b):
    """LayerNorm over the last axis, f32 statistics."""
    mean = jnp.mean(x, axis=-1, keepdims=True)
    c = x - mean
    var = jnp.mean(c * c, axis=-1, keepdims=True)
    return c * jax.lax.rsqrt(var + LN_EPS) * g + b


# --------------------- embedding LayerNorm (no residual) ----------------

def _emb_ln_kernel(x_ref, g_ref, b_ref, o_ref):
    o_ref[...] = _layernorm(x_ref[...], g_ref[...], b_ref[...])


def emb_layernorm(x, gamma, beta):
    M, D = x.shape
    return pl.pallas_call(
        _emb_ln_kernel,
        out_shape=jax.ShapeDtypeStruct((M, D), jnp.float32),
        in_specs=[_vmem()] * 3,
        out_specs=_vmem(),
    )(x, gamma.reshape(1, D), beta.reshape(1, D))


# --------------------- fused transformer encoder layer ------------------

def _encoder_layer_kernel(x_ref, mask_ref, qkv_w_ref, qkv_b_ref,
                          o_w_ref, o_b_ref, ln1_g_ref, ln1_b_ref,
                          f1_w_ref, f1_b_ref, f2_w_ref, f2_b_ref,
                          ln2_g_ref, ln2_b_ref, o_ref, *, batch, seq):
    x = x_ref[...]                                   # (B*S, D) f32
    xb = x.astype(jnp.bfloat16)

    # Fused Q|K|V projection: one (B*S, D) @ (D, 3D) MXU push.
    qkv = jnp.dot(xb, qkv_w_ref[...],
                  preferred_element_type=jnp.float32) + qkv_b_ref[...]

    # Additive mask built & broadcast in-kernel: (B, S) -> (B, 1, S).
    amask = ((1.0 - mask_ref[...]) * NEG_INF)[:, None, :]

    scale = 1.0 / (HEAD_DIM ** 0.5)
    o_w = o_w_ref[...]                               # (D, D) bf16
    attn = jnp.zeros((batch * seq, DIM), jnp.float32)

    # Heads are static column slices of the fused QKV result.  The per-head
    # output projection is accumulated, which equals concat(heads) @ o_w, so
    # no head-merge transpose is ever needed.
    for h in range(N_HEADS):
        lo = h * HEAD_DIM
        q3 = qkv[:, lo:lo + HEAD_DIM].reshape(batch, seq, HEAD_DIM)
        k3 = qkv[:, DIM + lo:DIM + lo + HEAD_DIM].reshape(batch, seq, HEAD_DIM)
        v3 = qkv[:, 2 * DIM + lo:2 * DIM + lo + HEAD_DIM].reshape(
            batch, seq, HEAD_DIM)

        s = jnp.einsum("bqd,bkd->bqk",
                       q3.astype(jnp.bfloat16), k3.astype(jnp.bfloat16),
                       preferred_element_type=jnp.float32) * scale
        s = s + amask
        s = s - jnp.max(s, axis=-1, keepdims=True)
        p = jnp.exp(s)                               # f32 softmax
        p = p * pl.reciprocal(jnp.sum(p, axis=-1, keepdims=True), approx=True)

        ctx = jnp.einsum("bqk,bkd->bqd",
                         p.astype(jnp.bfloat16), v3.astype(jnp.bfloat16),
                         preferred_element_type=jnp.float32)
        ctx2 = ctx.reshape(batch * seq, HEAD_DIM).astype(jnp.bfloat16)
        attn = attn + jnp.dot(ctx2, o_w[lo:lo + HEAD_DIM, :],
                              preferred_element_type=jnp.float32)
    attn = attn + o_b_ref[...]

    # Add & LayerNorm 1 (residual stays in VMEM).
    x1 = _layernorm(attn + x, ln1_g_ref[...], ln1_b_ref[...])

    # Fused FFN: (D -> FFN) GELU (FFN -> D); intermediate never hits HBM.
    ff = jnp.dot(x1.astype(jnp.bfloat16), f1_w_ref[...],
                 preferred_element_type=jnp.float32) + f1_b_ref[...]
    # TODO(synk): HF DistilBERT uses erf-GELU; tanh approximation used here.
    ff = jax.nn.gelu(ff, approximate=True)
    ff2 = jnp.dot(ff.astype(jnp.bfloat16), f2_w_ref[...],
                  preferred_element_type=jnp.float32) + f2_b_ref[...]

    # Add & LayerNorm 2.
    o_ref[...] = _layernorm(ff2 + x1, ln2_g_ref[...], ln2_b_ref[...])


def encoder_layer(x, mask_f32, lp, *, batch, seq):
    M, D = x.shape
    # TODO(synk): at real DistilBERT sizes (dim=768, seq=512) add a row-tiled
    # grid with BlockSpecs sized per generation (v7x 64 MiB VMEM, v6e 256-wide
    # MXU tiles, v5e 128-aligned tiles) and dimension_semantics=("parallel",...).
    return pl.pallas_call(
        functools.partial(_encoder_layer_kernel, batch=batch, seq=seq),
        out_shape=jax.ShapeDtypeStruct((M, D), jnp.float32),
        in_specs=[_vmem()] * 14,
        out_specs=_vmem(),
    )(x, mask_f32,
      lp["qkv_w"], lp["qkv_b"].reshape(1, 3 * DIM),
      lp["o_w"], lp["o_b"].reshape(1, DIM),
      lp["ln1_g"].reshape(1, DIM), lp["ln1_b"].reshape(1, DIM),
      lp["f1_w"], lp["f1_b"].reshape(1, FFN_DIM),
      lp["f2_w"], lp["f2_b"].reshape(1, DIM),
      lp["ln2_g"].reshape(1, DIM), lp["ln2_b"].reshape(1, DIM))


# ------------------------ fused classification head ---------------------

def _head_kernel(x_ref, pre_w_ref, pre_b_ref, cls_w_ref, cls_b_ref, o_ref):
    x = x_ref[...]                                   # (B, D) f32
    h = jnp.dot(x.astype(jnp.bfloat16), pre_w_ref[...],
                preferred_element_type=jnp.float32) + pre_b_ref[...]
    h = jnp.maximum(h, 0.0)                          # ReLU
    # TODO(synk): torch.nn.Dropout(0.3) is identity at inference.
    logits = jnp.dot(h.astype(jnp.bfloat16), cls_w_ref[...],
                     preferred_element_type=jnp.float32) + cls_b_ref[...]
    o_ref[...] = logits                              # (B, 128) lane-dense


def classifier_head(cls_tok, pre_w, pre_b, cls_w_pad, cls_b_pad):
    B = cls_tok.shape[0]
    out = pl.pallas_call(
        _head_kernel,
        out_shape=jax.ShapeDtypeStruct((B, CLS_PAD), jnp.float32),
        in_specs=[_vmem()] * 5,
        out_specs=_vmem(),
    )(cls_tok, pre_w, pre_b.reshape(1, DIM), cls_w_pad,
      cls_b_pad.reshape(1, CLS_PAD))
    return out[:, :N_CLASSES]


# ----------------------------- parameters ------------------------------

def init_params(key):
    keys = iter(jax.random.split(key, 64))

    def dense(shape):        # matmul weights stored bf16
        return (0.02 * jax.random.normal(next(keys), shape,
                                         jnp.float32)).astype(jnp.bfloat16)

    params = {
        "word_emb": 0.02 * jax.random.normal(next(keys), (VOCAB, DIM),
                                             jnp.float32),
        "pos_emb": 0.02 * jax.random.normal(next(keys), (MAX_POS, DIM),
                                            jnp.float32),
        "emb_ln_g": jnp.ones((DIM,), jnp.float32),
        "emb_ln_b": jnp.zeros((DIM,), jnp.float32),
        "layers": [],
        # classification head from DistilBERTClass.__init__
        "pre_w": dense((DIM, DIM)),
        "pre_b": jnp.zeros((DIM,), jnp.float32),
    }
    cls_w = dense((DIM, N_CLASSES))
    params["cls_w_pad"] = jnp.pad(cls_w, ((0, 0), (0, CLS_PAD - N_CLASSES)))
    params["cls_b_pad"] = jnp.zeros((CLS_PAD,), jnp.float32)

    for _ in range(N_LAYERS):
        q_w, k_w, v_w = dense((DIM, DIM)), dense((DIM, DIM)), dense((DIM, DIM))
        params["layers"].append({
            "qkv_w": jnp.concatenate([q_w, k_w, v_w], axis=1),   # (D, 3D) bf16
            "qkv_b": jnp.zeros((3 * DIM,), jnp.float32),
            "o_w": dense((DIM, DIM)), "o_b": jnp.zeros((DIM,), jnp.float32),
            "ln1_g": jnp.ones((DIM,), jnp.float32),
            "ln1_b": jnp.zeros((DIM,), jnp.float32),
            "f1_w": dense((DIM, FFN_DIM)),
            "f1_b": jnp.zeros((FFN_DIM,), jnp.float32),
            "f2_w": dense((FFN_DIM, DIM)),
            "f2_b": jnp.zeros((DIM,), jnp.float32),
            "ln2_g": jnp.ones((DIM,), jnp.float32),
            "ln2_b": jnp.zeros((DIM,), jnp.float32),
        })
    return params


# ------------------------------ forward --------------------------------

@jax.jit
def distilbert_class_forward(params, input_ids, attention_mask):
    B, S = input_ids.shape

    # ---- embeddings (gather is glue; residual-free LayerNorm in Pallas)
    word = params["word_emb"][input_ids]                    # (B, S, D)
    pos = params["pos_emb"][jnp.arange(S)][None, :, :]      # (1, S, D)
    emb = (word + pos).reshape(B * S, DIM)
    x = emb_layernorm(emb, params["emb_ln_g"], params["emb_ln_b"])
    # TODO(synk): embedding / hidden / classifier dropout are identity here
    # (inference mode); torch.nn.Dropout(0.3) only acts in training.

    mask_f = attention_mask.astype(jnp.float32)             # (B, S)

    for lp in params["layers"]:
        x = encoder_layer(x, mask_f, lp, batch=B, seq=S)

    hidden_state = x.reshape(B, S, DIM)
    cls_tok = hidden_state[:, 0]                             # (B, D)  [CLS]
    logits = classifier_head(cls_tok, params["pre_w"], params["pre_b"],
                             params["cls_w_pad"], params["cls_b_pad"])
    return logits                                            # (B, 4)


# ------------------------------- main ----------------------------------

if __name__ == "__main__":
    key = jax.random.PRNGKey(0)
    pkey, ikey = jax.random.split(key)

    B, S = 2, 8
    params = init_params(pkey)
    input_ids = jax.random.randint(ikey, (B, S), 0, VOCAB, dtype=jnp.int32)
    # second sequence has 2 padding positions masked out
    attention_mask = jnp.array(
        [[1, 1, 1, 1, 1, 1, 1, 1],
         [1, 1, 1, 1, 1, 1, 0, 0]], dtype=jnp.int32)

    logits = distilbert_class_forward(params, input_ids, attention_mask)
    logits = jax.block_until_ready(logits)
    assert logits.shape == (B, N_CLASSES) and logits.dtype == jnp.float32
    print("KERNEL_OK")
</pallas_src>

<mosaic_0001>
module attributes {stable_mosaic.version = 11 : i64} {
  func.func @_emb_ln_kernel(%arg0: memref<16x64xf32, #tpu.memory_space<vmem>>, %arg1: memref<1x64xf32, #tpu.memory_space<vmem>>, %arg2: memref<1x64xf32, #tpu.memory_space<vmem>>, %arg3: memref<16x64xf32, #tpu.memory_space<vmem>>) attributes {dimension_semantics = [], scalar_prefetch = 0 : i64, scratch_operands = 0 : i64, tpu.core_type = #tpu.core_type<tc>} {
    %c0 = arith.constant 0 : index
    %c0_0 = arith.constant 0 : index
    %0 = vector.load %arg0[%c0, %c0_0] : memref<16x64xf32, #tpu.memory_space<vmem>>, vector<16x64xf32>
    %c0_1 = arith.constant 0 : index
    %c0_2 = arith.constant 0 : index
    %1 = vector.load %arg1[%c0_1, %c0_2] : memref<1x64xf32, #tpu.memory_space<vmem>>, vector<1x64xf32>
    %c0_3 = arith.constant 0 : index
    %c0_4 = arith.constant 0 : index
    %2 = vector.load %arg2[%c0_3, %c0_4] : memref<1x64xf32, #tpu.memory_space<vmem>>, vector<1x64xf32>
    %cst = arith.constant dense<0.000000e+00> : vector<16xf32>
    %3 = vector.multi_reduction <add>, %0, %cst [1] : vector<16x64xf32> to vector<16xf32>
    %4 = vector.shape_cast %3 : vector<16xf32> to vector<16x1xf32>
    %cst_5 = arith.constant 6.400000e+01 : f32
    %5 = vector.broadcast %cst_5 : f32 to vector<16x1xf32>
    %6 = arith.divf %4, %5 : vector<16x1xf32>
    %7 = vector.broadcast %6 : vector<16x1xf32> to vector<16x64xf32>
    %8 = arith.subf %0, %7 : vector<16x64xf32>
    %9 = arith.mulf %8, %8 : vector<16x64xf32>
    %cst_6 = arith.constant dense<0.000000e+00> : vector<16xf32>
    %10 = vector.multi_reduction <add>, %9, %cst_6 [1] : vector<16x64xf32> to vector<16xf32>
    %11 = vector.shape_cast %10 : vector<16xf32> to vector<16x1xf32>
    %cst_7 = arith.constant 6.400000e+01 : f32
    %12 = vector.broadcast %cst_7 : f32 to vector<16x1xf32>
    %13 = arith.divf %11, %12 : vector<16x1xf32>
    %cst_8 = arith.constant 9.99999996E-13 : f32
    %14 = vector.broadcast %cst_8 : f32 to vector<16x1xf32>
    %15 = arith.addf %13, %14 : vector<16x1xf32>
    %16 = math.rsqrt %15 : vector<16x1xf32>
    %17 = vector.broadcast %16 : vector<16x1xf32> to vector<16x64xf32>
    %18 = arith.mulf %8, %17 : vector<16x64xf32>
    %19 = vector.broadcast %1 : vector<1x64xf32> to vector<16x64xf32>
    %20 = arith.mulf %18, %19 : vector<16x64xf32>
    %21 = vector.broadcast %2 : vector<1x64xf32> to vector<16x64xf32>
    %22 = arith.addf %20, %21 : vector<16x64xf32>
    %c0_9 = arith.constant 0 : index
    %c0_10 = arith.constant 0 : index
    %23 = vector.load %arg3[%c0_9, %c0_10] : memref<16x64xf32, #tpu.memory_space<vmem>>, vector<16x64xf32>
    tpu.vector_store %arg3[%c0_9, %c0_10], %22 {strides = array<i32>} : memref<16x64xf32, #tpu.memory_space<vmem>>, vector<16x64xf32>,
    return
  }
}

module attributes {stable_mosaic.version = 11 : i64} {
  func.func @_head_kernel(%arg0: memref<2x64xf32, #tpu.memory_space<vmem>>, %arg1: memref<64x64xbf16, #tpu.memory_space<vmem>>, %arg2: memref<1x64xf32, #tpu.memory_space<vmem>>, %arg3: memref<64x128xbf16, #tpu.memory_space<vmem>>, %arg4: memref<1x128xf32, #tpu.memory_space<vmem>>, %arg5: memref<2x128xf32, #tpu.memory_space<vmem>>) attributes {dimension_semantics = [], scalar_prefetch = 0 : i64, scratch_operands = 0 : i64, tpu.core_type = #tpu.core_type<tc>} {
    %c0 = arith.constant 0 : index
    %c0_0 = arith.constant 0 : index
    %0 = vector.load %arg0[%c0, %c0_0] : memref<2x64xf32, #tpu.memory_space<vmem>>, vector<2x64xf32>
    %1 = arith.truncf %0 : vector<2x64xf32> to vector<2x64xbf16>
    %c0_1 = arith.constant 0 : index
    %c0_2 = arith.constant 0 : index
    %2 = vector.load %arg1[%c0_1, %c0_2] : memref<64x64xbf16, #tpu.memory_space<vmem>>, vector<64x64xbf16>
    %cst = arith.constant dense<0.000000e+00> : vector<2x64xf32>
    %3 = tpu.matmul %1, %2, %cst {dimension_numbers = #tpu.dot_dimension_numbers<[1], [0], [0], [1], [0, 0, 1, 1], [], []>} : vector<2x64xbf16>, vector<64x64xbf16>, vector<2x64xf32> -> vector<2x64xf32>
    %c0_3 = arith.constant 0 : index
    %c0_4 = arith.constant 0 : index
    %4 = vector.load %arg2[%c0_3, %c0_4] : memref<1x64xf32, #tpu.memory_space<vmem>>, vector<1x64xf32>
    %5 = vector.broadcast %4 : vector<1x64xf32> to vector<2x64xf32>
    %6 = arith.addf %3, %5 : vector<2x64xf32>
    %cst_5 = arith.constant 0.000000e+00 : f32
    %7 = vector.broadcast %cst_5 : f32 to vector<2x64xf32>
    %8 = arith.maximumf %6, %7 : vector<2x64xf32>
    %9 = arith.truncf %8 : vector<2x64xf32> to vector<2x64xbf16>
    %c0_6 = arith.constant 0 : index
    %c0_7 = arith.constant 0 : index
    %10 = vector.load %arg3[%c0_6, %c0_7] : memref<64x128xbf16, #tpu.memory_space<vmem>>, vector<64x128xbf16>
    %cst_8 = arith.constant dense<0.000000e+00> : vector<2x128xf32>
    %11 = tpu.matmul %9, %10, %cst_8 {dimension_numbers = #tpu.dot_dimension_numbers<[1], [0], [0], [1], [0, 0, 1, 1], [], []>} : vector<2x64xbf16>, vector<64x128xbf16>, vector<2x128xf32> -> vector<2x128xf32>
    %c0_9 = arith.constant 0 : index
    %c0_10 = arith.constant 0 : index
    %12 = vector.load %arg4[%c0_9, %c0_10] : memref<1x128xf32, #tpu.memory_space<vmem>>, vector<1x128xf32>
    %13 = vector.broadcast %12 : vector<1x128xf32> to vector<2x128xf32>
    %14 = arith.addf %11, %13 : vector<2x128xf32>
    %c0_11 = arith.constant 0 : index
    %c0_12 = arith.constant 0 : index
    %15 = vector.load %arg5[%c0_11, %c0_12] : memref<2x128xf32, #tpu.memory_space<vmem>>, vector<2x128xf32>
    tpu.vector_store %arg5[%c0_11, %c0_12], %14 {strides = array<i32>} : memref<2x128xf32, #tpu.memory_space<vmem>>, vector<2x128xf32>,
    return
  }
}

module attributes {stable_mosaic.version = 11 : i64} {
  func.func @_encoder_layer_kernel(%arg0: memref<16x64xf32, #tpu.memory_space<vmem>>, %arg1: memref<2x8xf32, #tpu.memory_space<vmem>>, %arg2: memref<64x192xbf16, #tpu.memory_space<vmem>>, %arg3: memref<1x192xf32, #tpu.memory_space<vmem>>, %arg4: memref<64x64xbf16, #tpu.memory_space<vmem>>, %arg5: memref<1x64xf32, #tpu.memory_space<vmem>>, %arg6: memref<1x64xf32, #tpu.memory_space<vmem>>, %arg7: memref<1x64xf32, #tpu.memory_space<vmem>>, %arg8: memref<64x128xbf16, #tpu.memory_space<vmem>>, %arg9: memref<1x128xf32, #tpu.memory_space<vmem>>, %arg10: memref<128x64xbf16, #tpu.memory_space<vmem>>, %arg11: memref<1x64xf32, #tpu.memory_space<vmem>>, %arg12: memref<1x64xf32, #tpu.memory_space<vmem>>, %arg13: memref<1x64xf32, #tpu.memory_space<vmem>>, %arg14: memref<16x64xf32, #tpu.memory_space<vmem>>) attributes {dimension_semantics = [], scalar_prefetch = 0 : i64, scratch_operands = 0 : i64, tpu.core_type = #tpu.core_type<tc>} {
    %c0 = arith.constant 0 : index
    %c0_0 = arith.constant 0 : index
    %0 = vector.load %arg0[%c0, %c0_0] : memref<16x64xf32, #tpu.memory_space<vmem>>, vector<16x64xf32>
    %1 = arith.truncf %0 : vector<16x64xf32> to vector<16x64xbf16>
    %c0_1 = arith.constant 0 : index
    %c0_2 = arith.constant 0 : index
    %2 = vector.load %arg2[%c0_1, %c0_2] : memref<64x192xbf16, #tpu.memory_space<vmem>>, vector<64x192xbf16>
    %cst = arith.constant dense<0.000000e+00> : vector<16x192xf32>
    %3 = tpu.matmul %1, %2, %cst {dimension_numbers = #tpu.dot_dimension_numbers<[1], [0], [0], [1], [0, 0, 1, 1], [], []>} : vector<16x64xbf16>, vector<64x192xbf16>, vector<16x192xf32> -> vector<16x192xf32>
    %c0_3 = arith.constant 0 : index
    %c0_4 = arith.constant 0 : index
    %4 = vector.load %arg3[%c0_3, %c0_4] : memref<1x192xf32, #tpu.memory_space<vmem>>, vector<1x192xf32>
    %5 = vector.broadcast %4 : vector<1x192xf32> to vector<16x192xf32>
    %6 = arith.addf %3, %5 : vector<16x192xf32>
    %c0_5 = arith.constant 0 : index
    %c0_6 = arith.constant 0 : index
    %7 = vector.load %arg1[%c0_5, %c0_6] : memref<2x8xf32, #tpu.memory_space<vmem>>, vector<2x8xf32>
    %cst_7 = arith.constant 1.000000e+00 : f32
    %8 = vector.broadcast %cst_7 : f32 to vector<2x8xf32>
    %9 = arith.subf %8, %7 : vector<2x8xf32>
    %cst_8 = arith.constant -1.000000e+09 : f32
    %10 = vector.broadcast %cst_8 : f32 to vector<2x8xf32>
    %11 = arith.mulf %9, %10 : vector<2x8xf32>
    %12 = vector.shape_cast %11 : vector<2x8xf32> to vector<2x1x8xf32>
    %c0_9 = arith.constant 0 : index
    %c0_10 = arith.constant 0 : index
    %13 = vector.load %arg4[%c0_9, %c0_10] : memref<64x64xbf16, #tpu.memory_space<vmem>>, vector<64x64xbf16>
    %cst_11 = arith.constant 0.000000e+00 : f32
    %14 = vector.broadcast %cst_11 : f32 to vector<16x64xf32>
    %15 = vector.extract_strided_slice %6 {offsets = [0, 0], sizes = [16, 16], strides = [1, 1]} : vector<16x192xf32> to vector<16x16xf32>
    %16 = vector.shape_cast %15 : vector<16x16xf32> to vector<2x8x16xf32>
    %17 = vector.extract_strided_slice %6 {offsets = [0, 64], sizes = [16, 16], strides = [1, 1]} : vector<16x192xf32> to vector<16x16xf32>
    %18 = vector.shape_cast %17 : vector<16x16xf32> to vector<2x8x16xf32>
    %19 = vector.extract_strided_slice %6 {offsets = [0, 128], sizes = [16, 16], strides = [1, 1]} : vector<16x192xf32> to vector<16x16xf32>
    %20 = vector.shape_cast %19 : vector<16x16xf32> to vector<2x8x16xf32>
    %21 = arith.truncf %16 : vector<2x8x16xf32> to vector<2x8x16xbf16>
    %22 = arith.truncf %18 : vector<2x8x16xf32> to vector<2x8x16xbf16>
    "tpu.trace_start"() <{level = 10 : i32, message = "bqd,bkd->bqk"}> : () -> ()
    %cst_12 = arith.constant dense<0.000000e+00> : vector<2x8x8xf32>
    %23 = tpu.matmul %21, %22, %cst_12 {dimension_numbers = #tpu.dot_dimension_numbers<[2], [2], [1], [1], [0, 0, 0, 1, 1, 1], [0], [0]>} : vector<2x8x16xbf16>, vector<2x8x16xbf16>, vector<2x8x8xf32> -> vector<2x8x8xf32>
    "tpu.trace_stop"() : () -> ()
    %cst_13 = arith.constant 2.500000e-01 : f32
    %24 = vector.broadcast %cst_13 : f32 to vector<2x8x8xf32>
    %25 = arith.mulf %23, %24 : vector<2x8x8xf32>
    %26 = vector.broadcast %12 : vector<2x1x8xf32> to vector<2x8x8xf32>
    %27 = arith.addf %25, %26 : vector<2x8x8xf32>
    %cst_14 = arith.constant dense<0xFF800000> : vector<2x8xf32>
    %28 = vector.multi_reduction <maximumf>, %27, %cst_14 [2] : vector<2x8x8xf32> to vector<2x8xf32>
    %29 = vector.shape_cast %28 : vector<2x8xf32> to vector<2x8x1xf32>
    %30 = vector.broadcast %29 : vector<2x8x1xf32> to vector<2x8x8xf32>
    %31 = arith.subf %27, %30 : vector<2x8x8xf32>
    %32 = math.exp %31 : vector<2x8x8xf32>
    %cst_15 = arith.constant dense<0.000000e+00> : vector<2x8xf32>
    %33 = vector.multi_reduction <add>, %32, %cst_15 [2] : vector<2x8x8xf32> to vector<2x8xf32>
    %34 = vector.shape_cast %33 : vector<2x8xf32> to vector<2x8x1xf32>
    %35 = tpu.reciprocal %34 {approx = true} : vector<2x8x1xf32> -> vector<2x8x1xf32>
    %36 = vector.broadcast %35 : vector<2x8x1xf32> to vector<2x8x8xf32>
    %37 = arith.mulf %32, %36 : vector<2x8x8xf32>
    %38 = arith.truncf %37 : vector<2x8x8xf32> to vector<2x8x8xbf16>
    %39 = arith.truncf %20 : vector<2x8x16xf32> to vector<2x8x16xbf16>
    "tpu.trace_start"() <{level = 10 : i32, message = "bqk,bkd->bqd"}> : () -> ()
    %cst_16 = arith.constant dense<0.000000e+00> : vector<2x8x16xf32>
    %40 = tpu.matmul %38, %39, %cst_16 {dimension_numbers = #tpu.dot_dimension_numbers<[2], [1], [1], [2], [0, 0, 0, 1, 1, 2], [0], [0]>} : vector<2x8x8xbf16>, vector<2x8x16xbf16>, vector<2x8x16xf32> -> vector<2x8x16xf32>
    "tpu.trace_stop"() : () -> ()
    %41 = vector.shape_cast %40 : vector<2x8x16xf32> to vector<16x16xf32>
    %42 = arith.truncf %41 : vector<16x16xf32> to vector<16x16xbf16>
    %43 = vector.extract_strided_slice %13 {offsets = [0, 0], sizes = [16, 64], strides = [1, 1]} : vector<64x64xbf16> to vector<16x64xbf16>
    %cst_17 = arith.constant dense<0.000000e+00> : vector<16x64xf32>
    %44 = tpu.matmul %42, %43, %cst_17 {dimension_numbers = #tpu.dot_dimension_numbers<[1], [0], [0], [1], [0, 0, 1, 1], [], []>} : vector<16x16xbf16>, vector<16x64xbf16>, vector<16x64xf32> -> vector<16x64xf32>
    %45 = arith.addf %14, %44 : vector<16x64xf32>
    %46 = vector.extract_strided_slice %6 {offsets = [0, 16], sizes = [16, 16], strides = [1, 1]} : vector<16x192xf32> to vector<16x16xf32>
    %47 = vector.shape_cast %46 : vector<16x16xf32> to vector<2x8x16xf32>
    %48 = vector.extract_strided_slice %6 {offsets = [0, 80], sizes = [16, 16], strides = [1, 1]} : vector<16x192xf32> to vector<16x16xf32>
    %49 = vector.shape_cast %48 : vector<16x16xf32> to vector<2x8x16xf32>
    %50 = vector.extract_strided_slice %6 {offsets = [0, 144], sizes = [16, 16], strides = [1, 1]} : vector<16x192xf32> to vector<16x16xf32>
    %51 = vector.shape_cast %50 : vector<16x16xf32> to vector<2x8x16xf32>
    %52 = arith.truncf %47 : vector<2x8x16xf32> to vector<2x8x16xbf16>
    %53 = arith.truncf %49 : vector<2x8x16xf32> to vector<2x8x16xbf16>
    "tpu.trace_start"() <{level = 10 : i32, message = "bqd,bkd->bqk"}> : () -> ()
    %cst_18 = arith.constant dense<0.000000e+00> : vector<2x8x8xf32>
    %54 = tpu.matmul %52, %53, %cst_18 {dimension_numbers = #tpu.dot_dimension_numbers<[2], [2], [1], [1], [0, 0, 0, 1, 1, 1], [0], [0]>} : vector<2x8x16xbf16>, vector<2x8x16xbf16>, vector<2x8x8xf32> -> vector<2x8x8xf32>
    "tpu.trace_stop"() : () -> ()
    %cst_19 = arith.constant 2.500000e-01 : f32
    %55 = vector.broadcast %cst_19 : f32 to vector<2x8x8xf32>
    %56 = arith.mulf %54, %55 : vector<2x8x8xf32>
    %57 = vector.broadcast %12 : vector<2x1x8xf32> to vector<2x8x8xf32>
    %58 = arith.addf %56, %57 : vector<2x8x8xf32>
    %cst_20 = arith.constant dense<0xFF800000> : vector<2x8xf32>
    %59 = vector.multi_reduction <maximumf>, %58, %cst_20 [2] : vector<2x8x8xf32> to vector<2x8xf32>
    %60 = vector.shape_cast %59 : vector<2x8xf32> to vector<2x8x1xf32>
    %61 = vector.broadcast %60 : vector<2x8x1xf32> to vector<2x8x8xf32>
    %62 = arith.subf %58, %61 : vector<2x8x8xf32>
    %63 = math.exp %62 : vector<2x8x8xf32>
    %cst_21 = arith.constant dense<0.000000e+00> : vector<2x8xf32>
    %64 = vector.multi_reduction <add>, %63, %cst_21 [2] : vector<2x8x8xf32> to vector<2x8xf32>
    %65 = vector.shape_cast %64 : vector<2x8xf32> to vector<2x8x1xf32>
    %66 = tpu.reciprocal %65 {approx = true} : vector<2x8x1xf32> -> vector<2x8x1xf32>
    %67 = vector.broadcast %66 : vector<2x8x1xf32> to vector<2x8x8xf32>
    %68 = arith.mulf %63, %67 : vector<2x8x8xf32>
    %69 = arith.truncf %68 : vector<2x8x8xf32> to vector<2x8x8xbf16>
    %70 = arith.truncf %51 : vector<2x8x16xf32> to vector<2x8x16xbf16>
    "tpu.trace_start"() <{level = 10 : i32, message = "bqk,bkd->bqd"}> : () -> ()
    %cst_22 = arith.constant dense<0.000000e+00> : vector<2x8x16xf32>
    %71 = tpu.matmul %69, %70, %cst_22 {dimension_numbers = #tpu.dot_dimension_numbers<[2], [1], [1], [2], [0, 0, 0, 1, 1, 2], [0], [0]>} : vector<2x8x8xbf16>, vector<2x8x16xbf16>, vector<2x8x16xf32> -> vector<2x8x16xf32>
    "tpu.trace_stop"() : () -> ()
    %72 = vector.shape_cast %71 : vector<2x8x16xf32> to vector<16x16xf32>
    %73 = arith.truncf %72 : vector<16x16xf32> to vector<16x16xbf16>
    %74 = vector.extract_strided_slice %13 {offsets = [16, 0], sizes = [16, 64], strides = [1, 1]} : vector<64x64xbf16> to vector<16x64xbf16>
    %cst_23 = arith.constant dense<0.000000e+00> : vector<16x64xf32>
    %75 = tpu.matmul %73, %74, %cst_23 {dimension_numbers = #tpu.dot_dimension_numbers<[1], [0], [0], [1], [0, 0, 1, 1], [], []>} : vector<16x16xbf16>, vector<16x64xbf16>, vector<16x64xf32> -> vector<16x64xf32>
    %76 = arith.addf %45, %75 : vector<16x64xf32>
    %77 = vector.extract_strided_slice %6 {offsets = [0, 32], sizes = [16, 16], strides = [1, 1]} : vector<16x192xf32> to vector<16x16xf32>
    %78 = vector.shape_cast %77 : vector<16x16xf32> to vector<2x8x16xf32>
    %79 = vector.extract_strided_slice %6 {offsets = [0, 96], sizes = [16, 16], strides = [1, 1]} : vector<16x192xf32> to vector<16x16xf32>
    %80 = vector.shape_cast %79 : vector<16x16xf32> to vector<2x8x16xf32>
    %81 = vector.extract_strided_slice %6 {offsets = [0, 160], sizes = [16, 16], strides = [1, 1]} : vector<16x192xf32> to vector<16x16xf32>
    %82 = vector.shape_cast %81 : vector<16x16xf32> to vector<2x8x16xf32>
    %83 = arith.truncf %78 : vector<2x8x16xf32> to vector<2x8x16xbf16>
    %84 = arith.truncf %80 : vector<2x8x16xf32> to vector<2x8x16xbf16>
    "tpu.trace_start"() <{level = 10 : i32, message = "bqd,bkd->bqk"}> : () -> ()
    %cst_24 = arith.constant dense<0.000000e+00> : vector<2x8x8xf32>
    %85 = tpu.matmul %83, %84, %cst_24 {dimension_numbers = #tpu.dot_dimension_numbers<[2], [2], [1], [1], [0, 0, 0, 1, 1, 1], [0], [0]>} : vector<2x8x16xbf16>, vector<2x8x16xbf16>, vector<2x8x8xf32> -> vector<2x8x8xf32>
    "tpu.trace_stop"() : () -> ()
    %cst_25 = arith.constant 2.500000e-01 : f32
    %86 = vector.broadcast %cst_25 : f32 to vector<2x8x8xf32>
    %87 = arith.mulf %85, %86 : vector<2x8x8xf32>
    %88 = vector.broadcast %12 : vector<2x1x8xf32> to vector<2x8x8xf32>
    %89 = arith.addf %87, %88 : vector<2x8x8xf32>
    %cst_26 = arith.constant dense<0xFF800000> : vector<2x8xf32>
    %90 = vector.multi_reduction <maximumf>, %89, %cst_26 [2] : vector<2x8x8xf32> to vector<2x8xf32>
    %91 = vector.shape_cast %90 : vector<2x8xf32> to vector<2x8x1xf32>
    %92 = vector.broadcast %91 : vector<2x8x1xf32> to vector<2x8x8xf32>
    %93 = arith.subf %89, %92 : vector<2x8x8xf32>
    %94 = math.exp %93 : vector<2x8x8xf32>
    %cst_27 = arith.constant dense<0.000000e+00> : vector<2x8xf32>
    %95 = vector.multi_reduction <add>, %94, %cst_27 [2] : vector<2x8x8xf32> to vector<2x8xf32>
    %96 = vector.shape_cast %95 : vector<2x8xf32> to vector<2x8x1xf32>
    %97 = tpu.reciprocal %96 {approx = true} : vector<2x8x1xf32> -> vector<2x8x1xf32>
    %98 = vector.broadcast %97 : vector<2x8x1xf32> to vector<2x8x8xf32>
    %99 = arith.mulf %94, %98 : vector<2x8x8xf32>
    %100 = arith.truncf %99 : vector<2x8x8xf32> to vector<2x8x8xbf16>
    %101 = arith.truncf %82 : vector<2x8x16xf32> to vector<2x8x16xbf16>
    "tpu.trace_start"() <{level = 10 : i32, message = "bqk,bkd->bqd"}> : () -> ()
    %cst_28 = arith.constant dense<0.000000e+00> : vector<2x8x16xf32>
    %102 = tpu.matmul %100, %101, %cst_28 {dimension_numbers = #tpu.dot_dimension_numbers<[2], [1], [1], [2], [0, 0, 0, 1, 1, 2], [0], [0]>} : vector<2x8x8xbf16>, vector<2x8x16xbf16>, vector<2x8x16xf32> -> vector<2x8x16xf32>
    "tpu.trace_stop"() : () -> ()
    %103 = vector.shape_cast %102 : vector<2x8x16xf32> to vector<16x16xf32>
    %104 = arith.truncf %103 : vector<16x16xf32> to vector<16x16xbf16>
    %105 = vector.extract_strided_slice %13 {offsets = [32, 0], sizes = [16, 64], strides = [1, 1]} : vector<64x64xbf16> to vector<16x64xbf16>
    %cst_29 = arith.constant dense<0.000000e+00> : vector<16x64xf32>
    %106 = tpu.matmul %104, %105, %cst_29 {dimension_numbers = #tpu.dot_dimension_numbers<[1], [0], [0], [1], [0, 0, 1, 1], [], []>} : vector<16x16xbf16>, vector<16x64xbf16>, vector<16x64xf32> -> vector<16x64xf32>
    %107 = arith.addf %76, %106 : vector<16x64xf32>
    %108 = vector.extract_strided_slice %6 {offsets = [0, 48], sizes = [16, 16], strides = [1, 1]} : vector<16x192xf32> to vector<16x16xf32>
    %109 = vector.shape_cast %108 : vector<16x16xf32> to vector<2x8x16xf32>
    %110 = vector.extract_strided_slice %6 {offsets = [0, 112], sizes = [16, 16], strides = [1, 1]} : vector<16x192xf32> to vector<16x16xf32>
    %111 = vector.shape_cast %110 : vector<16x16xf32> to vector<2x8x16xf32>
    %112 = vector.extract_strided_slice %6 {offsets = [0, 176], sizes = [16, 16], strides = [1, 1]} : vector<16x192xf32> to vector<16x16xf32>
    %113 = vector.shape_cast %112 : vector<16x16xf32> to vector<2x8x16xf32>
    %114 = arith.truncf %109 : vector<2x8x16xf32> to vector<2x8x16xbf16>
    %115 = arith.truncf %111 : vector<2x8x16xf32> to vector<2x8x16xbf16>
    "tpu.trace_start"() <{level = 10 : i32, message = "bqd,bkd->bqk"}> : () -> ()
    %cst_30 = arith.constant dense<0.000000e+00> : vector<2x8x8xf32>
    %116 = tpu.matmul %114, %115, %cst_30 {dimension_numbers = #tpu.dot_dimension_numbers<[2], [2], [1], [1], [0, 0, 0, 1, 1, 1], [0], [0]>} : vector<2x8x16xbf16>, vector<2x8x16xbf16>, vector<2x8x8xf32> -> vector<2x8x8xf32>
    "tpu.trace_stop"() : () -> ()
    %cst_31 = arith.constant 2.500000e-01 : f32
    %117 = vector.broadcast %cst_31 : f32 to vector<2x8x8xf32>
    %118 = arith.mulf %116, %117 : vector<2x8x8xf32>
    %119 = vector.broadcast %12 : vector<2x1x8xf32> to vector<2x8x8xf32>
    %120 = arith.addf %118, %119 : vector<2x8x8xf32>
    %cst_32 = arith.constant dense<0xFF800000> : vector<2x8xf32>
    %121 = vector.multi_reduction <maximumf>, %120, %cst_32 [2] : vector<2x8x8xf32> to vector<2x8xf32>
    %122 = vector.shape_cast %121 : vector<2x8xf32> to vector<2x8x1xf32>
    %123 = vector.broadcast %122 : vector<2x8x1xf32> to vector<2x8x8xf32>
    %124 = arith.subf %120, %123 : vector<2x8x8xf32>
    %125 = math.exp %124 : vector<2x8x8xf32>
    %cst_33 = arith.constant dense<0.000000e+00> : vector<2x8xf32>
    %126 = vector.multi_reduction <add>, %125, %cst_33 [2] : vector<2x8x8xf32> to vector<2x8xf32>
    %127 = vector.shape_cast %126 : vector<2x8xf32> to vector<2x8x1xf32>
    %128 = tpu.reciprocal %127 {approx = true} : vector<2x8x1xf32> -> vector<2x8x1xf32>
    %129 = vector.broadcast %128 : vector<2x8x1xf32> to vector<2x8x8xf32>
    %130 = arith.mulf %125, %129 : vector<2x8x8xf32>
    %131 = arith.truncf %130 : vector<2x8x8xf32> to vector<2x8x8xbf16>
    %132 = arith.truncf %113 : vector<2x8x16xf32> to vector<2x8x16xbf16>
    "tpu.trace_start"() <{level = 10 : i32, message = "bqk,bkd->bqd"}> : () -> ()
    %cst_34 = arith.constant dense<0.000000e+00> : vector<2x8x16xf32>
    %133 = tpu.matmul %131, %132, %cst_34 {dimension_numbers = #tpu.dot_dimension_numbers<[2], [1], [1], [2], [0, 0, 0, 1, 1, 2], [0], [0]>} : vector<2x8x8xbf16>, vector<2x8x16xbf16>, vector<2x8x16xf32> -> vector<2x8x16xf32>
    "tpu.trace_stop"() : () -> ()
    %134 = vector.shape_cast %133 : vector<2x8x16xf32> to vector<16x16xf32>
    %135 = arith.truncf %134 : vector<16x16xf32> to vector<16x16xbf16>
    %136 = vector.extract_strided_slice %13 {offsets = [48, 0], sizes = [16, 64], strides = [1, 1]} : vector<64x64xbf16> to vector<16x64xbf16>
    %cst_35 = arith.constant dense<0.000000e+00> : vector<16x64xf32>
    %137 = tpu.matmul %135, %136, %cst_35 {dimension_numbers = #tpu.dot_dimension_numbers<[1], [0], [0], [1], [0, 0, 1, 1], [], []>} : vector<16x16xbf16>, vector<16x64xbf16>, vector<16x64xf32> -> vector<16x64xf32>
    %138 = arith.addf %107, %137 : vector<16x64xf32>
    %c0_36 = arith.constant 0 : index
    %c0_37 = arith.constant 0 : index
    %139 = vector.load %arg5[%c0_36, %c0_37] : memref<1x64xf32, #tpu.memory_space<vmem>>, vector<1x64xf32>
    %140 = vector.broadcast %139 : vector<1x64xf32> to vector<16x64xf32>
    %141 = arith.addf %138, %140 : vector<16x64xf32>
    %142 = arith.addf %141, %0 : vector<16x64xf32>
    %c0_38 = arith.constant 0 : index
    %c0_39 = arith.constant 0 : index
    %143 = vector.load %arg6[%c0_38, %c0_39] : memref<1x64xf32, #tpu.memory_space<vmem>>, vector<1x64xf32>
    %c0_40 = arith.constant 0 : index
    %c0_41 = arith.constant 0 : index
    %144 = vector.load %arg7[%c0_40, %c0_41] : memref<1x64xf32, #tpu.memory_space<vmem>>, vector<1x64xf32>
    %cst_42 = arith.constant dense<0.000000e+00> : vector<16xf32>
    %145 = vector.multi_reduction <add>, %142, %cst_42 [1] : vector<16x64xf32> to vector<16xf32>
    %146 = vector.shape_cast %145 : vector<16xf32> to vector<16x1xf32>
    %cst_43 = arith.constant 6.400000e+01 : f32
    %147 = vector.broadcast %cst_43 : f32 to vector<16x1xf32>
    %148 = arith.divf %146, %147 : vector<16x1xf32>
    %149 = vector.broadcast %148 : vector<16x1xf32> to vector<16x64xf32>
    %150 = arith.subf %142, %149 : vector<16x64xf32>
    %151 = arith.mulf %150, %150 : vector<16x64xf32>
    %cst_44 = arith.constant dense<0.000000e+00> : vector<16xf32>
    %152 = vector.multi_reduction <add>, %151, %cst_44 [1] : vector<16x64xf32> to vector<16xf32>
    %153 = vector.shape_cast %152 : vector<16xf32> to vector<16x1xf32>
    %cst_45 = arith.constant 6.400000e+01 : f32
    %154 = vector.broadcast %cst_45 : f32 to vector<16x1xf32>
    %155 = arith.divf %153, %154 : vector<16x1xf32>
    %cst_46 = arith.constant 9.99999996E-13 : f32
    %156 = vector.broadcast %cst_46 : f32 to vector<16x1xf32>
    %157 = arith.addf %155, %156 : vector<16x1xf32>
    %158 = math.rsqrt %157 : vector<16x1xf32>
    %159 = vector.broadcast %158 : vector<16x1xf32> to vector<16x64xf32>
    %160 = arith.mulf %150, %159 : vector<16x64xf32>
    %161 = vector.broadcast %143 : vector<1x64xf32> to vector<16x64xf32>
    %162 = arith.mulf %160, %161 : vector<16x64xf32>
    %163 = vector.broadcast %144 : vector<1x64xf32> to vector<16x64xf32>
    %164 = arith.addf %162, %163 : vector<16x64xf32>
    %165 = arith.truncf %164 : vector<16x64xf32> to vector<16x64xbf16>
    %c0_47 = arith.constant 0 : index
    %c0_48 = arith.constant 0 : index
    %166 = vector.load %arg8[%c0_47, %c0_48] : memref<64x128xbf16, #tpu.memory_space<vmem>>, vector<64x128xbf16>
    %cst_49 = arith.constant dense<0.000000e+00> : vector<16x128xf32>
    %167 = tpu.matmul %165, %166, %cst_49 {dimension_numbers = #tpu.dot_dimension_numbers<[1], [0], [0], [1], [0, 0, 1, 1], [], []>} : vector<16x64xbf16>, vector<64x128xbf16>, vector<16x128xf32> -> vector<16x128xf32>
    %c0_50 = arith.constant 0 : index
    %c0_51 = arith.constant 0 : index
    %168 = vector.load %arg9[%c0_50, %c0_51] : memref<1x128xf32, #tpu.memory_space<vmem>>, vector<1x128xf32>
    %169 = vector.broadcast %168 : vector<1x128xf32> to vector<16x128xf32>
    %170 = arith.addf %167, %169 : vector<16x128xf32>
    %171 = arith.mulf %170, %170 : vector<16x128xf32>
    %172 = arith.mulf %170, %171 : vector<16x128xf32>
    %cst_52 = arith.constant 4.471500e-02 : f32
    %173 = vector.broadcast %cst_52 : f32 to vector<16x128xf32>
    %174 = arith.mulf %173, %172 : vector<16x128xf32>
    %175 = arith.addf %170, %174 : vector<16x128xf32>
    %cst_53 = arith.constant 0.797884583 : f32
    %176 = vector.broadcast %cst_53 : f32 to vector<16x128xf32>
    %177 = arith.mulf %176, %175 : vector<16x128xf32>
    %178 = math.tanh %177 : vector<16x128xf32>
    %cst_54 = arith.constant 1.000000e+00 : f32
    %179 = vector.broadcast %cst_54 : f32 to vector<16x128xf32>
    %180 = arith.addf %179, %178 : vector<16x128xf32>
    %cst_55 = arith.constant 5.000000e-01 : f32
    %181 = vector.broadcast %cst_55 : f32 to vector<16x128xf32>
    %182 = arith.mulf %181, %180 : vector<16x128xf32>
    %183 = arith.mulf %170, %182 : vector<16x128xf32>
    %184 = arith.truncf %183 : vector<16x128xf32> to vector<16x128xbf16>
    %c0_56 = arith.constant 0 : index
    %c0_57 = arith.constant 0 : index
    %185 = vector.load %arg10[%c0_56, %c0_57] : memref<128x64xbf16, #tpu.memory_space<vmem>>, vector<128x64xbf16>
    %cst_58 = arith.constant dense<0.000000e+00> : vector<16x64xf32>
    %186 = tpu.matmul %184, %185, %cst_58 {dimension_numbers = #tpu.dot_dimension_numbers<[1], [0], [0], [1], [0, 0, 1, 1], [], []>} : vector<16x128xbf16>, vector<128x64xbf16>, vector<16x64xf32> -> vector<16x64xf32>
    %c0_59 = arith.constant 0 : index
    %c0_60 = arith.constant 0 : index
    %187 = vector.load %arg11[%c0_59, %c0_60] : memref<1x64xf32, #tpu.memory_space<vmem>>, vector<1x64xf32>
    %188 = vector.broadcast %187 : vector<1x64xf32> to vector<16x64xf32>
    %189 = arith.addf %186, %188 : vector<16x64xf32>
    %190 = arith.addf %189, %164 : vector<16x64xf32>
    %c0_61 = arith.constant 0 : index
    %c0_62 = arith.constant 0 : index
    %191 = vector.load %arg12[%c0_61, %c0_62] : memref<1x64xf32, #tpu.memory_space<vmem>>, vector<1x64xf32>
    %c0_63 = arith.constant 0 : index
    %c0_64 = arith.constant 0 : index
    %192 = vector.load %arg13[%c0_63, %c0_64] : memref<1x64xf32, #tpu.memory_space<vmem>>, vector<1x64xf32>
    %cst_65 = arith.constant dense<0.000000e+00> : vector<16xf32>
    %193 = vector.multi_reduction <add>, %190, %cst_65 [1] : vector<16x64xf32> to vector<16xf32>
    %194 = vector.shape_cast %193 : vector<16xf32> to vector<16x1xf32>
    %cst_66 = arith.constant 6.400000e+01 : f32
    %195 = vector.broadcast %cst_66 : f32 to vector<16x1xf32>
    %196 = arith.divf %194, %195 : vector<16x1xf32>
    %197 = vector.broadcast %196 : vector<16x1xf32> to vector<16x64xf32>
    %198 = arith.subf %190, %197 : vector<16x64xf32>
    %199 = arith.mulf %198, %198 : vector<16x64xf32>
    %cst_67 = arith.constant dense<0.000000e+00> : vector<16xf32>
    %200 = vector.multi_reduction <add>, %199, %cst_67 [1] : vector<16x64xf32> to vector<16xf32>
    %201 = vector.shape_cast %200 : vector<16xf32> to vector<16x1xf32>
    %cst_68 = arith.constant 6.400000e+01 : f32
    %202 = vector.broadcast %cst_68 : f32 to vector<16x1xf32>
    %203 = arith.divf %201, %202 : vector<16x1xf32>
    %cst_69 = arith.constant 9.99999996E-13 : f32
    %204 = vector.broadcast %cst_69 : f32 to vector<16x1xf32>
    %205 = arith.addf %203, %204 : vector<16x1xf32>
    %206 = math.rsqrt %205 : vector<16x1xf32>
    %207 = vector.broadcast %206 : vector<16x1xf32> to vector<16x64xf32>
    %208 = arith.mulf %198, %207 : vector<16x64xf32>
    %209 = vector.broadcast %191 : vector<1x64xf32> to vector<16x64xf32>
    %210 = arith.mulf %208, %209 : vector<16x64xf32>
    %211 = vector.broadcast %192 : vector<1x64xf32> to vector<16x64xf32>
    %212 = arith.addf %210, %211 : vector<16x64xf32>
    %c0_70 = arith.constant 0 : index
    %c0_71 = arith.constant 0 : index
    %213 = vector.load %arg14[%c0_70, %c0_71] : memref<16x64xf32, #tpu.memory_space<vmem>>, vector<16x64xf32>
    tpu.vector_store %arg14[%c0_70, %c0_71], %212 {strides = array<i32>} : memref<16x64xf32, #tpu.memory_space<vmem>>, vector<16x64xf32>,
    return
  }
}

</mosaic_0001>

<llo_original>
// kernel: distilbert_class_forward.4
$region0: #{distilbert_class_forward.4}
  #allocation0 [shape = 'u32[]', space=smem, size = 0x4, offset = 0x4, fixed_abs, tag = 'smem constant byte address 0x4 - core index']
  #allocation1 [shape = 'u32[72,128]{1,0:T(1,128)}', space=vmem, size = 0x9000, scoped, tag = 'internal scratch']
  %s0 = inlined_call_operand.vmem [shape: f32[16,64], index: 0, kind: input, shape index: {}]
  %s1 = inlined_call_operand.vmem [shape: f32[1,64], index: 1, kind: input, shape index: {}]
  %s2 = inlined_call_operand.vmem [shape: f32[1,64], index: 2, kind: input, shape index: {}]
  %s3 = inlined_call_operand.vmem [shape: f32[16,64], index: 3, kind: output, shape index: {}]
  %s4 = sld [smem:[#allocation0]]
  $region22: #{distilbert_class_forward.4} parent=0
    _
  %s6 = ssub.s32 1, %s4
  %s7 = scalar_select 0, %s6, %s4
  // Predicated region
  $region2: #{distilbert_class_forward.4} parent=0 // pred_check
    _
  $region3: #{distilbert_class_forward.4} parent=0 // pred_check_branch
    %9 = sbr.rel (0) target = $region5
  $region4: #{distilbert_class_forward.4} parent=0 // pred_region
    _
  $region5: #{distilbert_class_forward.4} parent=0 // pred_fallthru
    _
  // Predicated region
  $region6: #{distilbert_class_forward.4} parent=0 // pred_check
    _
  $region7: #{distilbert_class_forward.4} parent=0 // pred_check_branch
    %11 = sbr.rel (0) target = $region9
  $region8: #{distilbert_class_forward.4} parent=0 // pred_region
    _
  $region9: #{distilbert_class_forward.4} parent=0 // pred_fallthru
    _
  // Predicated region
  $region10: #{distilbert_class_forward.4} parent=0 // pred_check
    _
  $region11: #{distilbert_class_forward.4} parent=0 // pred_check_branch
    %13 = sbr.rel (0) target = $region13
  $region12: #{distilbert_class_forward.4} parent=0 // pred_region
    _
  $region13: #{distilbert_class_forward.4} parent=0 // pred_fallthru
    _
  %v14 = vld [vmem:[%s0] sm:$0xff]
  %v15 = vld [vmem:[%s0 + $0x8] sm:$0xff]
  %v16 = vld [vmem:[%s1] sm:$0x1]
  %v17 = vld [vmem:[%s2] sm:$0x1]
  %vm18 = vcmask 523264
  %v19 = vsel %vm18, %v14, 0.0
  %20 = vadd.xlane.f32.xlu0 %v19
  %v21 = vpop.xlane.xlu0 %20
  %v22 = vsel %vm18, %v15, 0.0
  %23 = vadd.xlane.f32.xlu0 %v22
  %v24 = vpop.xlane.xlu0 %23
  %v25 = vrcp.pop 64.0
  %v26 = vmul.f32 64.0, %v25
  %v27 = vsub.f32 1.0, %v26
  %v28 = vmul.f32 %v25, %v27
  %v29 = vadd.f32 %v25, %v28
  %vm30 = vweird.f32 %v25
  %v31 = vsel %vm30, %v25, %v29
  %v32 = vmul.f32 %v21, %v31
  %v33 = vmul.f32 %v24, %v31
  %v34 = vsub.f32 %v14, %v32
  %v35 = vsub.f32 %v15, %v33
  %v36 = vmul.f32 %v34, %v34
  %v37 = vmul.f32 %v35, %v35
  %v38 = vsel %vm18, %v36, 0.0
  %39 = vadd.xlane.f32.xlu0 %v38
  %v40 = vpop.xlane.xlu0 %39
  %v41 = vsel %vm18, %v37, 0.0
  %42 = vadd.xlane.f32.xlu0 %v41
  %v43 = vpop.xlane.xlu0 %42
  %v44 = vmul.f32 %v40, %v31
  %v45 = vmul.f32 %v43, %v31
  %v46 = vadd.f32 %v44, 1e-12
  %v47 = vadd.f32 %v45, 1e-12
  %v48 = vrsqrt.pop %v46
  %v49 = vmul.f32 %v48, %v46
  %v50 = vmul.f32 %v49, %v48
  %v51 = vmul.f32 0.5, %v50
  %v52 = vsub.f32 1.5, %v51
  %v53 = vmul.f32 %v48, %v52
  %vm54 = vweird.f32 %v46
  %vm55 = vweird.f32 %v48
  %vm56 = vmor %vm54, %vm55
  %v57 = vsel %vm56, %v48, %v53
  %v58 = vrsqrt.pop %v47
  %v59 = vmul.f32 %v58, %v47
  %v60 = vmul.f32 %v59, %v58
  %v61 = vmul.f32 0.5, %v60
  %v62 = vsub.f32 1.5, %v61
  %v63 = vmul.f32 %v58, %v62
  %vm64 = vweird.f32 %v47
  %vm65 = vweird.f32 %v58
  %vm66 = vmor %vm64, %vm65
  %v67 = vsel %vm66, %v58, %v63
  %v68 = vmul.f32 %v34, %v57
  %v69 = vmul.f32 %v35, %v67
  %v71 = vperm.slane %v16, 0
  %v73 = vmul.f32 %v68, %v71
  %v74 = vmul.f32 %v69, %v71
  %v76 = vperm.slane %v17, 0
  %v78 = vadd.f32 %v73, %v76
  %v79 = vadd.f32 %v74, %v76
  %80 = vst.msk [vmem:[%s3] sm:$0xff] %vm18, %v78
  %81 = vst.msk [vmem:[%s3 + $0x8] sm:$0xff] %vm18, %v79
  // Predicated region
  $region14: #{distilbert_class_forward.4} parent=0 // pred_check
    _
  $region15: #{distilbert_class_forward.4} parent=0 // pred_check_branch
    %83 = sbr.rel (0) target = $region17
  $region16: #{distilbert_class_forward.4} parent=0 // pred_region
    _
  $region17: #{distilbert_class_forward.4} parent=0 // pred_fallthru
    _
  // Predicated region
  $region18: #{distilbert_class_forward.4} parent=0 // pred_check
    _
  $region19: #{distilbert_class_forward.4} parent=0 // pred_check_branch
    %85 = sbr.rel (0) target = $region21
  $region20: #{distilbert_class_forward.4} parent=0 // pred_region
    _
  $region21: #{distilbert_class_forward.4} parent=0 // pred_fallthru
    _

// kernel: distilbert_class_forward.7
$region0: #{distilbert_class_forward.7}
  #allocation0 [shape = 'u32[]', space=smem, size = 0x4, offset = 0x4, fixed_abs, tag = 'smem constant byte address 0x4 - core index']
  #allocation1 [shape = 'u32[72,128]{1,0:T(1,128)}', space=vmem, size = 0x9000, scoped, tag = 'internal scratch']
  %s0 = inlined_call_operand.vmem [shape: f32[2,64], index: 0, kind: input, shape index: {}]
  %s1 = inlined_call_operand.vmem [shape: bf16[64,64], index: 1, kind: input, shape index: {}]
  %s2 = inlined_call_operand.vmem [shape: f32[1,64], index: 2, kind: input, shape index: {}]
  %s3 = inlined_call_operand.vmem [shape: bf16[64,128], index: 3, kind: input, shape index: {}]
  %s4 = inlined_call_operand.vmem [shape: f32[1,128], index: 4, kind: input, shape index: {}]
  %s5 = inlined_call_operand.hbm [shape: f32[2,128], index: 5, kind: output, shape index: {}]
  %s6 = sld [smem:[#allocation0]]
  $region30: #{distilbert_class_forward.7} parent=0
    _
  %s8 = ssub.s32 1, %s6
  %s9 = scalar_select 0, %s8, %s6
  $region1: #{distilbert_class_forward.7} parent=0
    #allocation2 [shape = 'u8[1024]{0}', space=vmem, size = 0x400, scoped, tag = 'output window, operand 0, single buffered']
    #allocation3 [shape = 's32[1]{0}', space=sflag, size = 0x4, scoped, tag = 'scoped memory for distilbert_class_forward.7']
    %10 = vsyncpa [#allocation3], 0
    // Predicated region
    $region2: #{distilbert_class_forward.7} parent=1 // pred_check
      _
    $region3: #{distilbert_class_forward.7} parent=1 // pred_check_branch
      %12 = sbr.rel (0) target = $region5
    $region4: #{distilbert_class_forward.7} parent=1 // pred_region
      _
    $region5: #{distilbert_class_forward.7} parent=1 // pred_fallthru
      _
    // Predicated region
    $region6: #{distilbert_class_forward.7} parent=1 // pred_check
      _
    $region7: #{distilbert_class_forward.7} parent=1 // pred_check_branch
      %14 = sbr.rel (0) target = $region9
    $region8: #{distilbert_class_forward.7} parent=1 // pred_region
      _
    $region9: #{distilbert_class_forward.7} parent=1 // pred_fallthru
      _
    // Predicated region
    $region10: #{distilbert_class_forward.7} parent=1 // pred_check
      _
    $region11: #{distilbert_class_forward.7} parent=1 // pred_check_branch
      %16 = sbr.rel (0) target = $region13
    $region12: #{distilbert_class_forward.7} parent=1 // pred_region
      _
    $region13: #{distilbert_class_forward.7} parent=1 // pred_fallthru
      _
    // Predicated region
    $region14: #{distilbert_class_forward.7} parent=1 // pred_check
      _
    $region15: #{distilbert_class_forward.7} parent=1 // pred_check_branch
      %18 = sbr.rel (0) target = $region17
    $region16: #{distilbert_class_forward.7} parent=1 // pred_region
      _
    $region17: #{distilbert_class_forward.7} parent=1 // pred_fallthru
      _
    // Predicated region
    $region18: #{distilbert_class_forward.7} parent=1 // pred_check
      _
    $region19: #{distilbert_class_forward.7} parent=1 // pred_check_branch
      %20 = sbr.rel (0) target = $region21
    $region20: #{distilbert_class_forward.7} parent=1 // pred_region
      _
    $region21: #{distilbert_class_forward.7} parent=1 // pred_fallthru
      _
    %v22 = vld [vmem:[%s0] sm:$0x3]
    %v23 = vpack.c.bf16 %v22, %v22
    %v24 = vld [vmem:[%s1] sm:$0xf]
    %v25 = vld [vmem:[%s1 + $0x4] sm:$0xf]
    %v26 = vld [vmem:[%s1 + $0x8] sm:$0xf]
    %v27 = vld [vmem:[%s1 + $0xc] sm:$0xf]
    %v28 = vld [vmem:[%s1 + $0x10] sm:$0xf]
    %v29 = vld [vmem:[%s1 + $0x14] sm:$0xf]
    %v30 = vld [vmem:[%s1 + $0x18] sm:$0xf]
    %v31 = vld [vmem:[%s1 + $0x1c] sm:$0xf]
    %v32 = vld [vmem:[%s2] sm:$0x1]
    %v34 = vperm.slane %v32, 0
    %v44 = vunpack.c.l.b16 %v24
    %v45 = vunpack.c.l.b16 %v25
    %v46 = vunpack.c.l.b16 %v26
    %v47 = vunpack.c.l.b16 %v27
    %v48 = vunpack.c.l.b16 %v28
    %v49 = vunpack.c.l.b16 %v29
    %v50 = vunpack.c.l.b16 %v30
    %v51 = vunpack.c.l.b16 %v31
    %v52 = vpack.c.b16 %v45, %v44
    %v53 = vpack.c.b16 %v47, %v46
    %v54 = vpack.c.b16 %v49, %v48
    %v55 = vpack.c.b16 %v51, %v50
    %vm60 = vcmask 523264
    %v62 = vsel %vm60, %v23, 0
    %64 = vmatpush.bf16.msra.mxu0 0
    %65 = vmatpush.bf16.msra.mxu0 0
    %66 = vmatpush.bf16.msra.mxu0 0
    %67 = vmatpush.bf16.msra.mxu0 0
    %68 = vmatpush.bf16.msra.mxu0 %v55
    %69 = vmatpush.bf16.msra.mxu0 %v54
    %70 = vmatpush.bf16.msra.mxu0 %v53
    %71 = vmatpush.bf16.msra.mxu0 %v52
    %72 = vmatmul.bf16.gmra.mxu0 %v62
    %v73 = vpop.f32.mrf.mxu0
    %v74 = vadd.f32 %v34, %v73
    %v75 = vpop.f32.mrf.mxu0
    %76 = vdwg.mxu0
    %v77 = vmax.f32 %v74, 0.0
    %v78 = vpack.c.bf16 %v77, %v77
    %v79 = vld [vmem:[%s3] sm:$0xf]
    %v80 = vld [vmem:[%s3 + $0x4] sm:$0xf]
    %v81 = vld [vmem:[%s3 + $0x8] sm:$0xf]
    %v82 = vld [vmem:[%s3 + $0xc] sm:$0xf]
    %v83 = vld [vmem:[%s3 + $0x10] sm:$0xf]
    %v84 = vld [vmem:[%s3 + $0x14] sm:$0xf]
    %v85 = vld [vmem:[%s3 + $0x18] sm:$0xf]
    %v86 = vld [vmem:[%s3 + $0x1c] sm:$0xf]
    %v87 = vld [vmem:[%s4] sm:$0x1]
    %v89 = vperm.slane %v87, 0
    %v99 = vunpack.c.l.b16 %v79
    %v100 = vunpack.c.l.b16 %v80
    %v101 = vunpack.c.l.b16 %v81
    %v102 = vunpack.c.l.b16 %v82
    %v103 = vunpack.c.l.b16 %v83
    %v104 = vunpack.c.l.b16 %v84
    %v105 = vunpack.c.l.b16 %v85
    %v106 = vunpack.c.l.b16 %v86
    %v107 = vpack.c.b16 %v100, %v99
    %v108 = vpack.c.b16 %v102, %v101
    %v109 = vpack.c.b16 %v104, %v103
    %v110 = vpack.c.b16 %v106, %v105
    %v116 = vsel %vm60, %v78, 0
    %118 = vmatpush.bf16.msra.mxu0 0
    %119 = vmatpush.bf16.msra.mxu0 0
    %120 = vmatpush.bf16.msra.mxu0 0
    %121 = vmatpush.bf16.msra.mxu0 0
    %122 = vmatpush.bf16.msra.mxu0 %v110
    %123 = vmatpush.bf16.msra.mxu0 %v109
    %124 = vmatpush.bf16.msra.mxu0 %v108
    %125 = vmatpush.bf16.msra.mxu0 %v107
    %126 = vmatmul.bf16.gmra.mxu0 %v116
    %v127 = vpop.f32.mrf.mxu0
    %v128 = vadd.f32 %v89, %v127
    %v129 = vpop.f32.mrf.mxu0
    %130 = vdwg.mxu0
    %131 = vst [vmem:[#allocation2] sm:$0x3] %v128
    // Predicated region
    $region22: #{distilbert_class_forward.7} parent=1 // pred_check
      _
    $region23: #{distilbert_class_forward.7} parent=1 // pred_check_branch
      %133 = sbr.rel (0) target = $region25
    $region24: #{distilbert_class_forward.7} parent=1 // pred_region
      %135 = vsyncadd [#allocation3], 0
      %s137 = sshll.u32 [#allocation2], 4
      %s138 = int_to_ptr.vmem [resolvable:$true] %s137
      %s139 = sshll.u32 %s5, 4
      %s140 = int_to_ptr.hbm [resolvable:$true] %s139
      %142 = dma.vmem_to_hbm [thread:$0]  %s138, 32, %s140, [#allocation3]
    $region25: #{distilbert_class_forward.7} parent=1 // pred_fallthru
      _
    // Predicated region
    $region26: #{distilbert_class_forward.7} parent=1 // pred_check
      _
    $region27: #{distilbert_class_forward.7} parent=1 // pred_check_branch
      %144 = sbr.rel (0) target = $region29
    $region28: #{distilbert_class_forward.7} parent=1 // pred_region
      %146 = dma.done [#allocation3], 32
    $region29: #{distilbert_class_forward.7} parent=1 // pred_fallthru
      _
    %147 = vsyncpa [#allocation3], 1

// kernel: distilbert_class_forward.5
$region0: #{distilbert_class_forward.5}
  #allocation0 [shape = 'u32[]', space=smem, size = 0x4, offset = 0x4, fixed_abs, tag = 'smem constant byte address 0x4 - core index']
  #allocation1 [shape = 'u32[72,128]{1,0:T(1,128)}', space=vmem, size = 0x9000, scoped, tag = 'internal scratch']
  %s0 = inlined_call_operand.vmem [shape: f32[16,64], index: 0, kind: input, shape index: {}]
  %s1 = inlined_call_operand.vmem [shape: f32[2,8], index: 1, kind: input, shape index: {}]
  %s2 = inlined_call_operand.vmem [shape: bf16[64,192], index: 2, kind: input, shape index: {}]
  %s3 = inlined_call_operand.vmem [shape: f32[1,192], index: 3, kind: input, shape index: {}]
  %s4 = inlined_call_operand.vmem [shape: bf16[64,64], index: 4, kind: input, shape index: {}]
  %s5 = inlined_call_operand.vmem [shape: f32[1,64], index: 5, kind: input, shape index: {}]
  %s6 = inlined_call_operand.vmem [shape: f32[1,64], index: 6, kind: input, shape index: {}]
  %s7 = inlined_call_operand.vmem [shape: f32[1,64], index: 7, kind: input, shape index: {}]
  %s8 = inlined_call_operand.vmem [shape: bf16[64,128], index: 8, kind: input, shape index: {}]
  %s9 = inlined_call_operand.vmem [shape: f32[1,128], index: 9, kind: input, shape index: {}]
  %s10 = inlined_call_operand.vmem [shape: bf16[128,64], index: 10, kind: input, shape index: {}]
  %s11 = inlined_call_operand.vmem [shape: f32[1,64], index: 11, kind: input, shape index: {}]
  %s12 = inlined_call_operand.vmem [shape: f32[1,64], index: 12, kind: input, shape index: {}]
  %s13 = inlined_call_operand.vmem [shape: f32[1,64], index: 13, kind: input, shape index: {}]
  %s14 = inlined_call_operand.vmem [shape: f32[16,64], index: 14, kind: output, shape index: {}]
  %s15 = sld [smem:[#allocation0]]
  $region66: #{distilbert_class_forward.5} parent=0
    _
  %s17 = ssub.s32 1, %s15
  %s18 = scalar_select 0, %s17, %s15
  // Predicated region
  $region2: #{distilbert_class_forward.5} parent=0 // pred_check
    _
  $region3: #{distilbert_class_forward.5} parent=0 // pred_check_branch
    %20 = sbr.rel (0) target = $region5
  $region4: #{distilbert_class_forward.5} parent=0 // pred_region
    _
  $region5: #{distilbert_class_forward.5} parent=0 // pred_fallthru
    _
  // Predicated region
  $region6: #{distilbert_class_forward.5} parent=0 // pred_check
    _
  $region7: #{distilbert_class_forward.5} parent=0 // pred_check_branch
    %22 = sbr.rel (0) target = $region9
  $region8: #{distilbert_class_forward.5} parent=0 // pred_region
    _
  $region9: #{distilbert_class_forward.5} parent=0 // pred_fallthru
    _
  // Predicated region
  $region10: #{distilbert_class_forward.5} parent=0 // pred_check
    _
  $region11: #{distilbert_class_forward.5} parent=0 // pred_check_branch
    %24 = sbr.rel (0) target = $region13
  $region12: #{distilbert_class_forward.5} parent=0 // pred_region
    _
  $region13: #{distilbert_class_forward.5} parent=0 // pred_fallthru
    _
  // Predicated region
  $region14: #{distilbert_class_forward.5} parent=0 // pred_check
    _
  $region15: #{distilbert_class_forward.5} parent=0 // pred_check_branch
    %26 = sbr.rel (0) target = $region17
  $region16: #{distilbert_class_forward.5} parent=0 // pred_region
    _
  $region17: #{distilbert_class_forward.5} parent=0 // pred_fallthru
    _
  // Predicated region
  $region18: #{distilbert_class_forward.5} parent=0 // pred_check
    _
  $region19: #{distilbert_class_forward.5} parent=0 // pred_check_branch
    %28 = sbr.rel (0) target = $region21
  $region20: #{distilbert_class_forward.5} parent=0 // pred_region
    _
  $region21: #{distilbert_class_forward.5} parent=0 // pred_fallthru
    _
  // Predicated region
  $region22: #{distilbert_class_forward.5} parent=0 // pred_check
    _
  $region23: #{distilbert_class_forward.5} parent=0 // pred_check_branch
    %30 = sbr.rel (0) target = $region25
  $region24: #{distilbert_class_forward.5} parent=0 // pred_region
    _
  $region25: #{distilbert_class_forward.5} parent=0 // pred_fallthru
    _
  // Predicated region
  $region26: #{distilbert_class_forward.5} parent=0 // pred_check
    _
  $region27: #{distilbert_class_forward.5} parent=0 // pred_check_branch
    %32 = sbr.rel (0) target = $region29
  $region28: #{distilbert_class_forward.5} parent=0 // pred_region
    _
  $region29: #{distilbert_class_forward.5} parent=0 // pred_fallthru
    _
  // Predicated region
  $region30: #{distilbert_class_forward.5} parent=0 // pred_check
    _
  $region31: #{distilbert_class_forward.5} parent=0 // pred_check_branch
    %34 = sbr.rel (0) target = $region33
  $region32: #{distilbert_class_forward.5} parent=0 // pred_region
    _
  $region33: #{distilbert_class_forward.5} parent=0 // pred_fallthru
    _
  // Predicated region
  $region34: #{distilbert_class_forward.5} parent=0 // pred_check
    _
  $region35: #{distilbert_class_forward.5} parent=0 // pred_check_branch
    %36 = sbr.rel (0) target = $region37
  $region36: #{distilbert_class_forward.5} parent=0 // pred_region
    _
  $region37: #{distilbert_class_forward.5} parent=0 // pred_fallthru
    _
  // Predicated region
  $region38: #{distilbert_class_forward.5} parent=0 // pred_check
    _
  $region39: #{distilbert_class_forward.5} parent=0 // pred_check_branch
    %38 = sbr.rel (0) target = $region41
  $region40: #{distilbert_class_forward.5} parent=0 // pred_region
    _
  $region41: #{distilbert_class_forward.5} parent=0 // pred_fallthru
    _
  // Predicated region
  $region42: #{distilbert_class_forward.5} parent=0 // pred_check
    _
  $region43: #{distilbert_class_forward.5} parent=0 // pred_check_branch
    %40 = sbr.rel (0) target = $region45
  $region44: #{distilbert_class_forward.5} parent=0 // pred_region
    _
  $region45: #{distilbert_class_forward.5} parent=0 // pred_fallthru
    _
  // Predicated region
  $region46: #{distilbert_class_forward.5} parent=0 // pred_check
    _
  $region47: #{distilbert_class_forward.5} parent=0 // pred_check_branch
    %42 = sbr.rel (0) target = $region49
  $region48: #{distilbert_class_forward.5} parent=0 // pred_region
    _
  $region49: #{distilbert_class_forward.5} parent=0 // pred_fallthru
    _
  // Predicated region
  $region50: #{distilbert_class_forward.5} parent=0 // pred_check
    _
  $region51: #{distilbert_class_forward.5} parent=0 // pred_check_branch
    %44 = sbr.rel (0) target = $region53
  $region52: #{distilbert_class_forward.5} parent=0 // pred_region
    _
  $region53: #{distilbert_class_forward.5} parent=0 // pred_fallthru
    _
  // Predicated region
  $region54: #{distilbert_class_forward.5} parent=0 // pred_check
    _
  $region55: #{distilbert_class_forward.5} parent=0 // pred_check_branch
    %46 = sbr.rel (0) target = $region57
  $region56: #{distilbert_class_forward.5} parent=0 // pred_region
    _
  $region57: #{distilbert_class_forward.5} parent=0 // pred_fallthru
    _
  %v48 = vld [vmem:[%s0] sm:$0xff]
  %v49 = vld [vmem:[%s0 + $0x8] sm:$0xff]
  %v50 = vpack.c.bf16 %v49, %v48
  %v51 = vld [vmem:[%s2] sm:$0xff]
  %v52 = vld [vmem:[%s2 + $0x8] sm:$0xff]
  %v53 = vld [vmem:[%s2 + $0x10] sm:$0xff]
  %v54 = vld [vmem:[%s2 + $0x18] sm:$0xff]
  %v55 = vld [vmem:[%s2 + $0x20] sm:$0xff]
  %v56 = vld [vmem:[%s2 + $0x28] sm:$0xff]
  %v57 = vld [vmem:[%s2 + $0x30] sm:$0xff]
  %v58 = vld [vmem:[%s2 + $0x38] sm:$0xff]
  %v59 = vld [vmem:[%s3] sm:$0x3]
  %v61 = vperm.slane %v59, 0
  %v62 = vperm.slane %v59, 1
  %v73 = vunpack.c.l.b16 %v51
  %v74 = vunpack.c.h.b16 %v51
  %v75 = vunpack.c.l.b16 %v52
  %v76 = vunpack.c.h.b16 %v52
  %v77 = vunpack.c.l.b16 %v53
  %v78 = vunpack.c.h.b16 %v53
  %v79 = vunpack.c.l.b16 %v54
  %v80 = vunpack.c.h.b16 %v54
  %v81 = vunpack.c.l.b16 %v55
  %v82 = vunpack.c.h.b16 %v55
  %v83 = vunpack.c.l.b16 %v56
  %v84 = vunpack.c.h.b16 %v56
  %v85 = vunpack.c.l.b16 %v57
  %v86 = vunpack.c.h.b16 %v57
  %v87 = vunpack.c.l.b16 %v58
  %v88 = vunpack.c.h.b16 %v58
  %v89 = vpack.c.b16 %v75, %v73
  %v90 = vpack.c.b16 %v76, %v74
  %v91 = vpack.c.b16 %v79, %v77
  %v92 = vpack.c.b16 %v80, %v78
  %v93 = vpack.c.b16 %v83, %v81
  %v94 = vpack.c.b16 %v84, %v82
  %v95 = vpack.c.b16 %v87, %v85
  %v96 = vpack.c.b16 %v88, %v86
  %vm105 = vcmask 523264
  %v107 = vsel %vm105, %v50, 0
  %109 = vmatpush.bf16.msra.mxu0 0
  %110 = vmatpush.bf16.msra.mxu0 0
  %111 = vmatpush.bf16.msra.mxu0 0
  %112 = vmatpush.bf16.msra.mxu0 0
  %113 = vmatpush.bf16.msra.mxu0 %v95
  %114 = vmatpush.bf16.msra.mxu0 %v93
  %115 = vmatpush.bf16.msra.mxu0 %v91
  %116 = vmatpush.bf16.msra.mxu0 %v89
  %117 = vmatmul.bf16.gmra.mxu0 %v107
  %v118 = vpop.f32.mrf.mxu0
  %v119 = vadd.f32 %v61, %v118
  %v120 = vpop.f32.mrf.mxu0
  %v121 = vadd.f32 %v61, %v120
  %122 = vdwg.mxu0
  %123 = vmatpush.bf16.msra.mxu0 0
  %124 = vmatpush.bf16.msra.mxu0 0
  %125 = vmatpush.bf16.msra.mxu0 0
  %126 = vmatpush.bf16.msra.mxu0 0
  %127 = vmatpush.bf16.msra.mxu0 %v96
  %128 = vmatpush.bf16.msra.mxu0 %v94
  %129 = vmatpush.bf16.msra.mxu0 %v92
  %130 = vmatpush.bf16.msra.mxu0 %v90
  %131 = vmatmul.bf16.gmra.mxu0 %v107
  %v132 = vpop.f32.mrf.mxu0
  %v133 = vadd.f32 %v62, %v132
  %v134 = vpop.f32.mrf.mxu0
  %v135 = vadd.f32 %v62, %v134
  %136 = vdwg.mxu0
  %v137 = vld [vmem:[%s1] sm:$0x3]
  %v138 = vsub.f32 1.0, %v137
  %v139 = vmul.f32 %v138, -1e+09
  %v141 = vrot.slane %v139, 1
  %v142 = vld [vmem:[%s4] sm:$0xf]
  %v143 = vld [vmem:[%s4 + $0x4] sm:$0xf]
  %v144 = vld [vmem:[%s4 + $0x8] sm:$0xf]
  %v145 = vld [vmem:[%s4 + $0xc] sm:$0xf]
  %v146 = vld [vmem:[%s4 + $0x10] sm:$0xf]
  %v147 = vld [vmem:[%s4 + $0x14] sm:$0xf]
  %v148 = vld [vmem:[%s4 + $0x18] sm:$0xf]
  %v149 = vld [vmem:[%s4 + $0x1c] sm:$0xf]
  %v150 = vpack.c.bf16 %v119, %v119
  %v151 = vpack.c.bf16 %v121, %v121
  %v153 = vunpack.c.l.b16 %v150
  %v154 = vpack.c.b16 %v153, %v153
  %155 = vrot.lane.b32.xlu0 %v154, 64
  %v156 = vpop.permute.xlu0 %155
  %vm157 = vcmask 130048
  %v159 = vsel %vm157, %v150, 0
  %v162 = vsel %vm157, %v156, 0
  %164 = vmatpush.bf16.xpose.msra.mxu0 0
  %165 = vmatpush.bf16.xpose.msra.mxu0 0
  %166 = vmatpush.bf16.xpose.msra.mxu0 0
  %167 = vmatpush.bf16.xpose.msra.mxu0 0
  %168 = vmatpush.bf16.xpose.msra.mxu0 0
  %169 = vmatpush.bf16.xpose.msra.mxu0 0
  %170 = vmatpush.bf16.xpose.msra.mxu0 0
  %171 = vmatpush.bf16.xpose.msra.mxu0 %v162
  %172 = vmatmul.bf16.gmra.mxu0 %v159
  %v173 = vpop.f32.mrf.mxu0
  %v174 = vadd.f32 0.0, %v173
  %v175 = vpop.f32.mrf.mxu0
  %176 = vdwg.mxu0
  %v178 = vunpack.c.l.b16 %v151
  %v179 = vpack.c.b16 %v178, %v178
  %180 = vrot.lane.b32.xlu0 %v179, 64
  %v181 = vpop.permute.xlu0 %180
  %v183 = vsel %vm157, %v151, 0
  %v186 = vsel %vm157, %v181, 0
  %188 = vmatpush.bf16.xpose.msra.mxu0 0
  %189 = vmatpush.bf16.xpose.msra.mxu0 0
  %190 = vmatpush.bf16.xpose.msra.mxu0 0
  %191 = vmatpush.bf16.xpose.msra.mxu0 0
  %192 = vmatpush.bf16.xpose.msra.mxu0 0
  %193 = vmatpush.bf16.xpose.msra.mxu0 0
  %194 = vmatpush.bf16.xpose.msra.mxu0 0
  %195 = vmatpush.bf16.xpose.msra.mxu0 %v186
  %196 = vmatmul.bf16.gmra.mxu0 %v183
  %v197 = vpop.f32.mrf.mxu0
  %v198 = vadd.f32 0.0, %v197
  %v199 = vpop.f32.mrf.mxu0
  %200 = vdwg.mxu0
  %v201 = vmul.f32 %v174, 0.25
  %v202 = vmul.f32 %v198, 0.25
  %v203 = vperm.slane %v139, 0
  %v204 = vperm.slane %v141, 0
  %v207 = vadd.f32 %v201, %v203
  %v208 = vadd.f32 %v202, %v204
  %vm209 = vcmask 64512
  %v210 = vsel %vm209, %v207, -inf
  %211 = vmax.xlane.f32.xlu0 %v210
  %v212 = vpop.xlane.xlu0 %211
  %v213 = vsel %vm209, %v208, -inf
  %214 = vmax.xlane.f32.xlu0 %v213
  %v215 = vpop.xlane.xlu0 %214
  %v216 = vsub.f32 %v207, %v212
  %v217 = vsub.f32 %v208, %v215
  %v218 = vmul.f32 %v216, 1.442695
  %v219 = vpow.pop %v218
  %v220 = vmul.f32 %v217, 1.442695
  %v221 = vpow.pop %v220
  %v222 = vsel %vm209, %v219, 0.0
  %223 = vadd.xlane.f32.xlu0 %v222
  %v224 = vpop.xlane.xlu0 %223
  %v225 = vsel %vm209, %v221, 0.0
  %226 = vadd.xlane.f32.xlu0 %v225
  %v227 = vpop.xlane.xlu0 %226
  %v228 = vrcp.pop %v224
  %v229 = vrcp.pop %v227
  %v230 = vmul.f32 %v219, %v228
  %v231 = vmul.f32 %v221, %v229
  %v232 = vpack.c.bf16 %v230, %v230
  %v233 = vpack.c.bf16 %v231, %v231
  %v234 = vpack.c.bf16 %v133, %v133
  %v235 = vpack.c.bf16 %v135, %v135
  %v237 = vsel %vm209, %v232, 0
  %vm239 = vcmask 1043456
  %v241 = vsel %vm239, %v234, 0
  %243 = vmatpush.bf16.msra.mxu0 0
  %244 = vmatpush.bf16.msra.mxu0 0
  %245 = vmatpush.bf16.msra.mxu0 0
  %246 = vmatpush.bf16.msra.mxu0 0
  %247 = vmatpush.bf16.msra.mxu0 0
  %248 = vmatpush.bf16.msra.mxu0 0
  %249 = vmatpush.bf16.msra.mxu0 0
  %250 = vmatpush.bf16.msra.mxu0 %v241
  %251 = vmatmul.bf16.gmra.mxu0 %v237
  %v252 = vpop.f32.mrf.mxu0
  %v253 = vadd.f32 0.0, %v252
  %v254 = vpop.f32.mrf.mxu0
  %255 = vdwg.mxu0
  %v257 = vsel %vm209, %v233, 0
  %v260 = vsel %vm239, %v235, 0
  %262 = vmatpush.bf16.msra.mxu0 0
  %263 = vmatpush.bf16.msra.mxu0 0
  %264 = vmatpush.bf16.msra.mxu0 0
  %265 = vmatpush.bf16.msra.mxu0 0
  %266 = vmatpush.bf16.msra.mxu0 0
  %267 = vmatpush.bf16.msra.mxu0 0
  %268 = vmatpush.bf16.msra.mxu0 0
  %269 = vmatpush.bf16.msra.mxu0 %v260
  %270 = vmatmul.bf16.gmra.mxu0 %v257
  %v271 = vpop.f32.mrf.mxu0
  %v272 = vadd.f32 0.0, %v271
  %v273 = vpop.f32.mrf.mxu0
  %274 = vdwg.mxu0
  %v275 = vpack.c.bf16 %v272, %v253
  %276 = vrot.lane.b32.xlu0 %v154, 112
  %v277 = vpop.permute.xlu0 %276
  %278 = vrot.lane.b32.xlu0 %v154, 48
  %v279 = vpop.permute.xlu0 %278
  %v281 = vsel %vm157, %v277, 0
  %v284 = vsel %vm157, %v279, 0
  %286 = vmatpush.bf16.xpose.msra.mxu0 0
  %287 = vmatpush.bf16.xpose.msra.mxu0 0
  %288 = vmatpush.bf16.xpose.msra.mxu0 0
  %289 = vmatpush.bf16.xpose.msra.mxu0 0
  %290 = vmatpush.bf16.xpose.msra.mxu0 0
  %291 = vmatpush.bf16.xpose.msra.mxu0 0
  %292 = vmatpush.bf16.xpose.msra.mxu0 0
  %293 = vmatpush.bf16.xpose.msra.mxu0 %v284
  %294 = vmatmul.bf16.gmra.mxu0 %v281
  %v295 = vpop.f32.mrf.mxu0
  %v296 = vadd.f32 0.0, %v295
  %v297 = vpop.f32.mrf.mxu0
  %298 = vdwg.mxu0
  %299 = vrot.lane.b32.xlu0 %v179, 112
  %v300 = vpop.permute.xlu0 %299
  %301 = vrot.lane.b32.xlu0 %v179, 48
  %v302 = vpop.permute.xlu0 %301
  %v304 = vsel %vm157, %v300, 0
  %v307 = vsel %vm157, %v302, 0
  %309 = vmatpush.bf16.xpose.msra.mxu0 0
  %310 = vmatpush.bf16.xpose.msra.mxu0 0
  %311 = vmatpush.bf16.xpose.msra.mxu0 0
  %312 = vmatpush.bf16.xpose.msra.mxu0 0
  %313 = vmatpush.bf16.xpose.msra.mxu0 0
  %314 = vmatpush.bf16.xpose.msra.mxu0 0
  %315 = vmatpush.bf16.xpose.msra.mxu0 0
  %316 = vmatpush.bf16.xpose.msra.mxu0 %v307
  %317 = vmatmul.bf16.gmra.mxu0 %v304
  %v318 = vpop.f32.mrf.mxu0
  %v319 = vadd.f32 0.0, %v318
  %v320 = vpop.f32.mrf.mxu0
  %321 = vdwg.mxu0
  %v322 = vmul.f32 %v296, 0.25
  %v323 = vmul.f32 %v319, 0.25
  %v324 = vadd.f32 %v322, %v203
  %v325 = vadd.f32 %v323, %v204
  %v326 = vsel %vm209, %v324, -inf
  %327 = vmax.xlane.f32.xlu0 %v326
  %v328 = vpop.xlane.xlu0 %327
  %v329 = vsel %vm209, %v325, -inf
  %330 = vmax.xlane.f32.xlu0 %v329
  %v331 = vpop.xlane.xlu0 %330
  %v332 = vsub.f32 %v324, %v328
  %v333 = vsub.f32 %v325, %v331
  %v334 = vmul.f32 %v332, 1.442695
  %v335 = vpow.pop %v334
  %v336 = vmul.f32 %v333, 1.442695
  %v337 = vpow.pop %v336
  %v338 = vsel %vm209, %v335, 0.0
  %339 = vadd.xlane.f32.xlu0 %v338
  %v340 = vpop.xlane.xlu0 %339
  %v341 = vsel %vm209, %v337, 0.0
  %342 = vadd.xlane.f32.xlu0 %v341
  %v343 = vpop.xlane.xlu0 %342
  %v344 = vrcp.pop %v340
  %v345 = vrcp.pop %v343
  %v346 = vmul.f32 %v335, %v344
  %v347 = vmul.f32 %v337, %v345
  %v348 = vpack.c.bf16 %v346, %v346
  %v349 = vpack.c.bf16 %v347, %v347
  %v351 = vunpack.c.l.b16 %v234
  %v352 = vpack.c.b16 %v351, %v351
  %353 = vrot.lane.b32.xlu0 %v352, 112
  %v354 = vpop.permute.xlu0 %353
  %v356 = vsel %vm209, %v348, 0
  %v359 = vsel %vm239, %v354, 0
  %361 = vmatpush.bf16.msra.mxu0 0
  %362 = vmatpush.bf16.msra.mxu0 0
  %363 = vmatpush.bf16.msra.mxu0 0
  %364 = vmatpush.bf16.msra.mxu0 0
  %365 = vmatpush.bf16.msra.mxu0 0
  %366 = vmatpush.bf16.msra.mxu0 0
  %367 = vmatpush.bf16.msra.mxu0 0
  %368 = vmatpush.bf16.msra.mxu0 %v359
  %369 = vmatmul.bf16.gmra.mxu0 %v356
  %v370 = vpop.f32.mrf.mxu0
  %v371 = vadd.f32 0.0, %v370
  %v372 = vpop.f32.mrf.mxu0
  %373 = vdwg.mxu0
  %v375 = vunpack.c.l.b16 %v235
  %v376 = vpack.c.b16 %v375, %v375
  %377 = vrot.lane.b32.xlu0 %v376, 112
  %v378 = vpop.permute.xlu0 %377
  %v380 = vsel %vm209, %v349, 0
  %v383 = vsel %vm239, %v378, 0
  %385 = vmatpush.bf16.msra.mxu0 0
  %386 = vmatpush.bf16.msra.mxu0 0
  %387 = vmatpush.bf16.msra.mxu0 0
  %388 = vmatpush.bf16.msra.mxu0 0
  %389 = vmatpush.bf16.msra.mxu0 0
  %390 = vmatpush.bf16.msra.mxu0 0
  %391 = vmatpush.bf16.msra.mxu0 0
  %392 = vmatpush.bf16.msra.mxu0 %v383
  %393 = vmatmul.bf16.gmra.mxu0 %v380
  %v394 = vpop.f32.mrf.mxu0
  %v395 = vadd.f32 0.0, %v394
  %v396 = vpop.f32.mrf.mxu0
  %397 = vdwg.mxu0
  %v398 = vpack.c.bf16 %v395, %v371
  %v401 = vunpack.c.l.b16 %v144
  %v402 = vunpack.c.l.b16 %v145
  %v403 = vpack.c.b16 %v402, %v401
  %v406 = vsel %vm157, %v398, 0
  %408 = vmatpush.bf16.msra.mxu0 0
  %409 = vmatpush.bf16.msra.mxu0 0
  %410 = vmatpush.bf16.msra.mxu0 0
  %411 = vmatpush.bf16.msra.mxu0 0
  %412 = vmatpush.bf16.msra.mxu0 0
  %413 = vmatpush.bf16.msra.mxu0 0
  %414 = vmatpush.bf16.msra.mxu0 0
  %415 = vmatpush.bf16.msra.mxu0 %v403
  %416 = vmatmul.bf16.gmra.mxu0 %v406
  %v417 = vpop.f32.mrf.mxu0
  %v418 = vadd.f32 0.0, %v417
  %v419 = vpop.f32.mrf.mxu0
  %v420 = vadd.f32 0.0, %v419
  %421 = vdwg.mxu0
  %v424 = vunpack.c.l.b16 %v142
  %v425 = vunpack.c.l.b16 %v143
  %v426 = vpack.c.b16 %v425, %v424
  %v429 = vsel %vm157, %v275, 0
  %431 = vmatpush.bf16.msra.mxu0 0
  %432 = vmatpush.bf16.msra.mxu0 0
  %433 = vmatpush.bf16.msra.mxu0 0
  %434 = vmatpush.bf16.msra.mxu0 0
  %435 = vmatpush.bf16.msra.mxu0 0
  %436 = vmatpush.bf16.msra.mxu0 0
  %437 = vmatpush.bf16.msra.mxu0 0
  %438 = vmatpush.bf16.msra.mxu0 %v426
  %439 = vmatmul.bf16.gmra.mxu0 %v429
  %v440 = vpop.f32.mrf.mxu0
  %v441 = vadd.f32 %v418, %v440
  %v442 = vpop.f32.mrf.mxu0
  %v443 = vadd.f32 %v420, %v442
  %444 = vdwg.mxu0
  %445 = vrot.lane.b32.xlu0 %v154, 96
  %v446 = vpop.permute.xlu0 %445
  %447 = vrot.lane.b32.xlu0 %v154, 32
  %v448 = vpop.permute.xlu0 %447
  %v450 = vsel %vm157, %v446, 0
  %v453 = vsel %vm157, %v448, 0
  %455 = vmatpush.bf16.xpose.msra.mxu0 0
  %456 = vmatpush.bf16.xpose.msra.mxu0 0
  %457 = vmatpush.bf16.xpose.msra.mxu0 0
  %458 = vmatpush.bf16.xpose.msra.mxu0 0
  %459 = vmatpush.bf16.xpose.msra.mxu0 0
  %460 = vmatpush.bf16.xpose.msra.mxu0 0
  %461 = vmatpush.bf16.xpose.msra.mxu0 0
  %462 = vmatpush.bf16.xpose.msra.mxu0 %v453
  %463 = vmatmul.bf16.gmra.mxu0 %v450
  %v464 = vpop.f32.mrf.mxu0
  %v465 = vadd.f32 0.0, %v464
  %v466 = vpop.f32.mrf.mxu0
  %467 = vdwg.mxu0
  %468 = vrot.lane.b32.xlu0 %v179, 96
  %v469 = vpop.permute.xlu0 %468
  %470 = vrot.lane.b32.xlu0 %v179, 32
  %v471 = vpop.permute.xlu0 %470
  %v473 = vsel %vm157, %v469, 0
  %v476 = vsel %vm157, %v471, 0
  %478 = vmatpush.bf16.xpose.msra.mxu0 0
  %479 = vmatpush.bf16.xpose.msra.mxu0 0
  %480 = vmatpush.bf16.xpose.msra.mxu0 0
  %481 = vmatpush.bf16.xpose.msra.mxu0 0
  %482 = vmatpush.bf16.xpose.msra.mxu0 0
  %483 = vmatpush.bf16.xpose.msra.mxu0 0
  %484 = vmatpush.bf16.xpose.msra.mxu0 0
  %485 = vmatpush.bf16.xpose.msra.mxu0 %v476
  %486 = vmatmul.bf16.gmra.mxu0 %v473
  %v487 = vpop.f32.mrf.mxu0
  %v488 = vadd.f32 0.0, %v487
  %v489 = vpop.f32.mrf.mxu0
  %490 = vdwg.mxu0
  %v491 = vmul.f32 %v465, 0.25
  %v492 = vmul.f32 %v488, 0.25
  %v493 = vadd.f32 %v491, %v203
  %v494 = vadd.f32 %v492, %v204
  %v495 = vsel %vm209, %v493, -inf
  %496 = vmax.xlane.f32.xlu0 %v495
  %v497 = vpop.xlane.xlu0 %496
  %v498 = vsel %vm209, %v494, -inf
  %499 = vmax.xlane.f32.xlu0 %v498
  %v500 = vpop.xlane.xlu0 %499
  %v501 = vsub.f32 %v493, %v497
  %v502 = vsub.f32 %v494, %v500
  %v503 = vmul.f32 %v501, 1.442695
  %v504 = vpow.pop %v503
  %v505 = vmul.f32 %v502, 1.442695
  %v506 = vpow.pop %v505
  %v507 = vsel %vm209, %v504, 0.0
  %508 = vadd.xlane.f32.xlu0 %v507
  %v509 = vpop.xlane.xlu0 %508
  %v510 = vsel %vm209, %v506, 0.0
  %511 = vadd.xlane.f32.xlu0 %v510
  %v512 = vpop.xlane.xlu0 %511
  %v513 = vrcp.pop %v509
  %v514 = vrcp.pop %v512
  %v515 = vmul.f32 %v504, %v513
  %v516 = vmul.f32 %v506, %v514
  %v517 = vpack.c.bf16 %v515, %v515
  %v518 = vpack.c.bf16 %v516, %v516
  %519 = vrot.lane.b32.xlu0 %v352, 96
  %v520 = vpop.permute.xlu0 %519
  %v522 = vsel %vm209, %v517, 0
  %v525 = vsel %vm239, %v520, 0
  %527 = vmatpush.bf16.msra.mxu0 0
  %528 = vmatpush.bf16.msra.mxu0 0
  %529 = vmatpush.bf16.msra.mxu0 0
  %530 = vmatpush.bf16.msra.mxu0 0
  %531 = vmatpush.bf16.msra.mxu0 0
  %532 = vmatpush.bf16.msra.mxu0 0
  %533 = vmatpush.bf16.msra.mxu0 0
  %534 = vmatpush.bf16.msra.mxu0 %v525
  %535 = vmatmul.bf16.gmra.mxu0 %v522
  %v536 = vpop.f32.mrf.mxu0
  %v537 = vadd.f32 0.0, %v536
  %v538 = vpop.f32.mrf.mxu0
  %539 = vdwg.mxu0
  %540 = vrot.lane.b32.xlu0 %v376, 96
  %v541 = vpop.permute.xlu0 %540
  %v543 = vsel %vm209, %v518, 0
  %v546 = vsel %vm239, %v541, 0
  %548 = vmatpush.bf16.msra.mxu0 0
  %549 = vmatpush.bf16.msra.mxu0 0
  %550 = vmatpush.bf16.msra.mxu0 0
  %551 = vmatpush.bf16.msra.mxu0 0
  %552 = vmatpush.bf16.msra.mxu0 0
  %553 = vmatpush.bf16.msra.mxu0 0
  %554 = vmatpush.bf16.msra.mxu0 0
  %555 = vmatpush.bf16.msra.mxu0 %v546
  %556 = vmatmul.bf16.gmra.mxu0 %v543
  %v557 = vpop.f32.mrf.mxu0
  %v558 = vadd.f32 0.0, %v557
  %v559 = vpop.f32.mrf.mxu0
  %560 = vdwg.mxu0
  %v561 = vpack.c.bf16 %v558, %v537
  %v564 = vunpack.c.l.b16 %v146
  %v565 = vunpack.c.l.b16 %v147
  %v566 = vpack.c.b16 %v565, %v564
  %v569 = vsel %vm157, %v561, 0
  %571 = vmatpush.bf16.msra.mxu0 0
  %572 = vmatpush.bf16.msra.mxu0 0
  %573 = vmatpush.bf16.msra.mxu0 0
  %574 = vmatpush.bf16.msra.mxu0 0
  %575 = vmatpush.bf16.msra.mxu0 0
  %576 = vmatpush.bf16.msra.mxu0 0
  %577 = vmatpush.bf16.msra.mxu0 0
  %578 = vmatpush.bf16.msra.mxu0 %v566
  %579 = vmatmul.bf16.gmra.mxu0 %v569
  %v580 = vpop.f32.mrf.mxu0
  %v581 = vadd.f32 0.0, %v580
  %v582 = vpop.f32.mrf.mxu0
  %v583 = vadd.f32 0.0, %v582
  %584 = vdwg.mxu0
  %v585 = vadd.f32 %v441, %v581
  %v586 = vadd.f32 %v443, %v583
  %587 = vrot.lane.b32.xlu0 %v154, 80
  %v588 = vpop.permute.xlu0 %587
  %589 = vrot.lane.b32.xlu0 %v154, 16
  %v590 = vpop.permute.xlu0 %589
  %v592 = vsel %vm157, %v588, 0
  %v595 = vsel %vm157, %v590, 0
  %597 = vmatpush.bf16.xpose.msra.mxu0 0
  %598 = vmatpush.bf16.xpose.msra.mxu0 0
  %599 = vmatpush.bf16.xpose.msra.mxu0 0
  %600 = vmatpush.bf16.xpose.msra.mxu0 0
  %601 = vmatpush.bf16.xpose.msra.mxu0 0
  %602 = vmatpush.bf16.xpose.msra.mxu0 0
  %603 = vmatpush.bf16.xpose.msra.mxu0 0
  %604 = vmatpush.bf16.xpose.msra.mxu0 %v595
  %605 = vmatmul.bf16.gmra.mxu0 %v592
  %v606 = vpop.f32.mrf.mxu0
  %v607 = vadd.f32 0.0, %v606
  %v608 = vpop.f32.mrf.mxu0
  %609 = vdwg.mxu0
  %610 = vrot.lane.b32.xlu0 %v179, 80
  %v611 = vpop.permute.xlu0 %610
  %612 = vrot.lane.b32.xlu0 %v179, 16
  %v613 = vpop.permute.xlu0 %612
  %v615 = vsel %vm157, %v611, 0
  %v618 = vsel %vm157, %v613, 0
  %620 = vmatpush.bf16.xpose.msra.mxu0 0
  %621 = vmatpush.bf16.xpose.msra.mxu0 0
  %622 = vmatpush.bf16.xpose.msra.mxu0 0
  %623 = vmatpush.bf16.xpose.msra.mxu0 0
  %624 = vmatpush.bf16.xpose.msra.mxu0 0
  %625 = vmatpush.bf16.xpose.msra.mxu0 0
  %626 = vmatpush.bf16.xpose.msra.mxu0 0
  %627 = vmatpush.bf16.xpose.msra.mxu0 %v618
  %628 = vmatmul.bf16.gmra.mxu0 %v615
  %v629 = vpop.f32.mrf.mxu0
  %v630 = vadd.f32 0.0, %v629
  %v631 = vpop.f32.mrf.mxu0
  %632 = vdwg.mxu0
  %v633 = vmul.f32 %v607, 0.25
  %v634 = vmul.f32 %v630, 0.25
  %v635 = vadd.f32 %v633, %v203
  %v636 = vadd.f32 %v634, %v204
  %v637 = vsel %vm209, %v635, -inf
  %638 = vmax.xlane.f32.xlu0 %v637
  %v639 = vpop.xlane.xlu0 %638
  %v640 = vsel %vm209, %v636, -inf
  %641 = vmax.xlane.f32.xlu0 %v640
  %v642 = vpop.xlane.xlu0 %641
  %v643 = vsub.f32 %v635, %v639
  %v644 = vsub.f32 %v636, %v642
  %v645 = vmul.f32 %v643, 1.442695
  %v646 = vpow.pop %v645
  %v647 = vmul.f32 %v644, 1.442695
  %v648 = vpow.pop %v647
  %v649 = vsel %vm209, %v646, 0.0
  %650 = vadd.xlane.f32.xlu0 %v649
  %v651 = vpop.xlane.xlu0 %650
  %v652 = vsel %vm209, %v648, 0.0
  %653 = vadd.xlane.f32.xlu0 %v652
  %v654 = vpop.xlane.xlu0 %653
  %v655 = vrcp.pop %v651
  %v656 = vrcp.pop %v654
  %v657 = vmul.f32 %v646, %v655
  %v658 = vmul.f32 %v648, %v656
  %v659 = vpack.c.bf16 %v657, %v657
  %v660 = vpack.c.bf16 %v658, %v658
  %661 = vrot.lane.b32.xlu0 %v352, 80
  %v662 = vpop.permute.xlu0 %661
  %v664 = vsel %vm209, %v659, 0
  %v667 = vsel %vm239, %v662, 0
  %669 = vmatpush.bf16.msra.mxu0 0
  %670 = vmatpush.bf16.msra.mxu0 0
  %671 = vmatpush.bf16.msra.mxu0 0
  %672 = vmatpush.bf16.msra.mxu0 0
  %673 = vmatpush.bf16.msra.mxu0 0
  %674 = vmatpush.bf16.msra.mxu0 0
  %675 = vmatpush.bf16.msra.mxu0 0
  %676 = vmatpush.bf16.msra.mxu0 %v667
  %677 = vmatmul.bf16.gmra.mxu0 %v664
  %v678 = vpop.f32.mrf.mxu0
  %v679 = vadd.f32 0.0, %v678
  %v680 = vpop.f32.mrf.mxu0
  %681 = vdwg.mxu0
  %682 = vrot.lane.b32.xlu0 %v376, 80
  %v683 = vpop.permute.xlu0 %682
  %v685 = vsel %vm209, %v660, 0
  %v688 = vsel %vm239, %v683, 0
  %690 = vmatpush.bf16.msra.mxu0 0
  %691 = vmatpush.bf16.msra.mxu0 0
  %692 = vmatpush.bf16.msra.mxu0 0
  %693 = vmatpush.bf16.msra.mxu0 0
  %694 = vmatpush.bf16.msra.mxu0 0
  %695 = vmatpush.bf16.msra.mxu0 0
  %696 = vmatpush.bf16.msra.mxu0 0
  %697 = vmatpush.bf16.msra.mxu0 %v688
  %698 = vmatmul.bf16.gmra.mxu0 %v685
  %v699 = vpop.f32.mrf.mxu0
  %v700 = vadd.f32 0.0, %v699
  %v701 = vpop.f32.mrf.mxu0
  %702 = vdwg.mxu0
  %v703 = vpack.c.bf16 %v700, %v679
  %v706 = vunpack.c.l.b16 %v148
  %v707 = vunpack.c.l.b16 %v149
  %v708 = vpack.c.b16 %v707, %v706
  %v711 = vsel %vm157, %v703, 0
  %713 = vmatpush.bf16.msra.mxu0 0
  %714 = vmatpush.bf16.msra.mxu0 0
  %715 = vmatpush.bf16.msra.mxu0 0
  %716 = vmatpush.bf16.msra.mxu0 0
  %717 = vmatpush.bf16.msra.mxu0 0
  %718 = vmatpush.bf16.msra.mxu0 0
  %719 = vmatpush.bf16.msra.mxu0 0
  %720 = vmatpush.bf16.msra.mxu0 %v708
  %721 = vmatmul.bf16.gmra.mxu0 %v711
  %v722 = vpop.f32.mrf.mxu0
  %v723 = vadd.f32 0.0, %v722
  %v724 = vpop.f32.mrf.mxu0
  %v725 = vadd.f32 0.0, %v724
  %726 = vdwg.mxu0
  %v727 = vadd.f32 %v585, %v723
  %v728 = vadd.f32 %v586, %v725
  %v729 = vld [vmem:[%s5] sm:$0x1]
  %v731 = vperm.slane %v729, 0
  %v733 = vadd.f32 %v727, %v731
  %v734 = vadd.f32 %v728, %v731
  %v735 = vadd.f32 %v733, %v48
  %v736 = vadd.f32 %v734, %v49
  %v737 = vld [vmem:[%s6] sm:$0x1]
  %v738 = vld [vmem:[%s7] sm:$0x1]
  %v739 = vsel %vm105, %v735, 0.0
  %740 = vadd.xlane.f32.xlu0 %v739
  %v741 = vpop.xlane.xlu0 %740
  %v742 = vsel %vm105, %v736, 0.0
  %743 = vadd.xlane.f32.xlu0 %v742
  %v744 = vpop.xlane.xlu0 %743
  %v745 = vrcp.pop 64.0
  %v746 = vmul.f32 64.0, %v745
  %v747 = vsub.f32 1.0, %v746
  %v748 = vmul.f32 %v745, %v747
  %v749 = vadd.f32 %v745, %v748
  %vm750 = vweird.f32 %v745
  %v751 = vsel %vm750, %v745, %v749
  %v752 = vmul.f32 %v741, %v751
  %v753 = vmul.f32 %v744, %v751
  %v754 = vsub.f32 %v735, %v752
  %v755 = vsub.f32 %v736, %v753
  %v756 = vmul.f32 %v754, %v754
  %v757 = vmul.f32 %v755, %v755
  %v758 = vsel %vm105, %v756, 0.0
  %759 = vadd.xlane.f32.xlu0 %v758
  %v760 = vpop.xlane.xlu0 %759
  %v761 = vsel %vm105, %v757, 0.0
  %762 = vadd.xlane.f32.xlu0 %v761
  %v763 = vpop.xlane.xlu0 %762
  %v764 = vmul.f32 %v760, %v751
  %v765 = vmul.f32 %v763, %v751
  %v766 = vadd.f32 %v764, 1e-12
  %v767 = vadd.f32 %v765, 1e-12
  %v768 = vrsqrt.pop %v766
  %v769 = vmul.f32 %v768, %v766
  %v770 = vmul.f32 %v769, %v768
  %v771 = vmul.f32 0.5, %v770
  %v772 = vsub.f32 1.5, %v771
  %v773 = vmul.f32 %v768, %v772
  %vm774 = vweird.f32 %v766
  %vm775 = vweird.f32 %v768
  %vm776 = vmor %vm774, %vm775
  %v777 = vsel %vm776, %v768, %v773
  %v778 = vrsqrt.pop %v767
  %v779 = vmul.f32 %v778, %v767
  %v780 = vmul.f32 %v779, %v778
  %v781 = vmul.f32 0.5, %v780
  %v782 = vsub.f32 1.5, %v781
  %v783 = vmul.f32 %v778, %v782
  %vm784 = vweird.f32 %v767
  %vm785 = vweird.f32 %v778
  %vm786 = vmor %vm784, %vm785
  %v787 = vsel %vm786, %v778, %v783
  %v788 = vmul.f32 %v754, %v777
  %v789 = vmul.f32 %v755, %v787
  %v791 = vperm.slane %v737, 0
  %v793 = vmul.f32 %v788, %v791
  %v794 = vmul.f32 %v789, %v791
  %v796 = vperm.slane %v738, 0
  %v798 = vadd.f32 %v793, %v796
  %v799 = vadd.f32 %v794, %v796
  %v800 = vpack.c.bf16 %v799, %v798
  %v801 = vld [vmem:[%s8] sm:$0xf]
  %v802 = vld [vmem:[%s8 + $0x4] sm:$0xf]
  %v803 = vld [vmem:[%s8 + $0x8] sm:$0xf]
  %v804 = vld [vmem:[%s8 + $0xc] sm:$0xf]
  %v805 = vld [vmem:[%s8 + $0x10] sm:$0xf]
  %v806 = vld [vmem:[%s8 + $0x14] sm:$0xf]
  %v807 = vld [vmem:[%s8 + $0x18] sm:$0xf]
  %v808 = vld [vmem:[%s8 + $0x1c] sm:$0xf]
  %v809 = vld [vmem:[%s9] sm:$0x1]
  %v811 = vperm.slane %v809, 0
  %v821 = vunpack.c.l.b16 %v801
  %v822 = vunpack.c.l.b16 %v802
  %v823 = vunpack.c.l.b16 %v803
  %v824 = vunpack.c.l.b16 %v804
  %v825 = vunpack.c.l.b16 %v805
  %v826 = vunpack.c.l.b16 %v806
  %v827 = vunpack.c.l.b16 %v807
  %v828 = vunpack.c.l.b16 %v808
  %v829 = vpack.c.b16 %v822, %v821
  %v830 = vpack.c.b16 %v824, %v823
  %v831 = vpack.c.b16 %v826, %v825
  %v832 = vpack.c.b16 %v828, %v827
  %v838 = vsel %vm105, %v800, 0
  %840 = vmatpush.bf16.msra.mxu0 0
  %841 = vmatpush.bf16.msra.mxu0 0
  %842 = vmatpush.bf16.msra.mxu0 0
  %843 = vmatpush.bf16.msra.mxu0 0
  %844 = vmatpush.bf16.msra.mxu0 %v832
  %845 = vmatpush.bf16.msra.mxu0 %v831
  %846 = vmatpush.bf16.msra.mxu0 %v830
  %847 = vmatpush.bf16.msra.mxu0 %v829
  %848 = vmatmul.bf16.gmra.mxu0 %v838
  %v849 = vpop.f32.mrf.mxu0
  %v850 = vadd.f32 %v811, %v849
  %v851 = vpop.f32.mrf.mxu0
  %v852 = vadd.f32 %v811, %v851
  %853 = vdwg.mxu0
  %v854 = vmul.f32 %v850, %v850
  %v855 = vmul.f32 %v852, %v852
  %v856 = vmul.f32 %v850, %v854
  %v857 = vmul.f32 %v852, %v855
  %v858 = vmul.f32 %v856, 0.044715
  %v859 = vmul.f32 %v857, 0.044715
  %v860 = vadd.f32 %v850, %v858
  %v861 = vadd.f32 %v852, %v859
  %v862 = vmul.f32 %v860, 0.7978846
  %v863 = vmul.f32 %v861, 0.7978846
  %v864 = vtanh.pop %v862
  %v865 = vtanh.pop %v863
  %v866 = vadd.f32 %v864, 1.0
  %v867 = vadd.f32 %v865, 1.0
  %v868 = vmul.f32 %v866, 0.5
  %v869 = vmul.f32 %v867, 0.5
  %v870 = vmul.f32 %v850, %v868
  %v871 = vmul.f32 %v852, %v869
  %v872 = vpack.c.bf16 %v871, %v870
  %v873 = vld [vmem:[%s10] sm:$0xf]
  %v874 = vld [vmem:[%s10 + $0x4] sm:$0xf]
  %v875 = vld [vmem:[%s10 + $0x8] sm:$0xf]
  %v876 = vld [vmem:[%s10 + $0xc] sm:$0xf]
  %v877 = vld [vmem:[%s10 + $0x10] sm:$0xf]
  %v878 = vld [vmem:[%s10 + $0x14] sm:$0xf]
  %v879 = vld [vmem:[%s10 + $0x18] sm:$0xf]
  %v880 = vld [vmem:[%s10 + $0x1c] sm:$0xf]
  %v881 = vld [vmem:[%s10 + $0x20] sm:$0xf]
  %v882 = vld [vmem:[%s10 + $0x24] sm:$0xf]
  %v883 = vld [vmem:[%s10 + $0x28] sm:$0xf]
  %v884 = vld [vmem:[%s10 + $0x2c] sm:$0xf]
  %v885 = vld [vmem:[%s10 + $0x30] sm:$0xf]
  %v886 = vld [vmem:[%s10 + $0x34] sm:$0xf]
  %v887 = vld [vmem:[%s10 + $0x38] sm:$0xf]
  %v888 = vld [vmem:[%s10 + $0x3c] sm:$0xf]
  %v889 = vld [vmem:[%s11] sm:$0x1]
  %v891 = vperm.slane %v889, 0
  %v909 = vunpack.c.l.b16 %v873
  %v910 = vunpack.c.l.b16 %v874
  %v911 = vunpack.c.l.b16 %v875
  %v912 = vunpack.c.l.b16 %v876
  %v913 = vunpack.c.l.b16 %v877
  %v914 = vunpack.c.l.b16 %v878
  %v915 = vunpack.c.l.b16 %v879
  %v916 = vunpack.c.l.b16 %v880
  %v917 = vunpack.c.l.b16 %v881
  %v918 = vunpack.c.l.b16 %v882
  %v919 = vunpack.c.l.b16 %v883
  %v920 = vunpack.c.l.b16 %v884
  %v921 = vunpack.c.l.b16 %v885
  %v922 = vunpack.c.l.b16 %v886
  %v923 = vunpack.c.l.b16 %v887
  %v924 = vunpack.c.l.b16 %v888
  %v925 = vpack.c.b16 %v910, %v909
  %v926 = vpack.c.b16 %v912, %v911
  %v927 = vpack.c.b16 %v914, %v913
  %v928 = vpack.c.b16 %v916, %v915
  %v929 = vpack.c.b16 %v918, %v917
  %v930 = vpack.c.b16 %v920, %v919
  %v931 = vpack.c.b16 %v922, %v921
  %v932 = vpack.c.b16 %v924, %v923
  %941 = vmatpush.bf16.msra.mxu0 %v932
  %942 = vmatpush.bf16.msra.mxu0 %v931
  %943 = vmatpush.bf16.msra.mxu0 %v930
  %944 = vmatpush.bf16.msra.mxu0 %v929
  %945 = vmatpush.bf16.msra.mxu0 %v928
  %946 = vmatpush.bf16.msra.mxu0 %v927
  %947 = vmatpush.bf16.msra.mxu0 %v926
  %948 = vmatpush.bf16.msra.mxu0 %v925
  %949 = vmatmul.bf16.gmra.mxu0 %v872
  %v950 = vpop.f32.mrf.mxu0
  %v951 = vadd.f32 %v891, %v950
  %v952 = vpop.f32.mrf.mxu0
  %v953 = vadd.f32 %v891, %v952
  %954 = vdwg.mxu0
  %v955 = vadd.f32 %v951, %v798
  %v956 = vadd.f32 %v953, %v799
  %v957 = vld [vmem:[%s12] sm:$0x1]
  %v958 = vld [vmem:[%s13] sm:$0x1]
  %v959 = vsel %vm105, %v955, 0.0
  %960 = vadd.xlane.f32.xlu0 %v959
  %v961 = vpop.xlane.xlu0 %960
  %v962 = vsel %vm105, %v956, 0.0
  %963 = vadd.xlane.f32.xlu0 %v962
  %v964 = vpop.xlane.xlu0 %963
  %v965 = vmul.f32 %v961, %v751
  %v966 = vmul.f32 %v964, %v751
  %v967 = vsub.f32 %v955, %v965
  %v968 = vsub.f32 %v956, %v966
  %v969 = vmul.f32 %v967, %v967
  %v970 = vmul.f32 %v968, %v968
  %v971 = vsel %vm105, %v969, 0.0
  %972 = vadd.xlane.f32.xlu0 %v971
  %v973 = vpop.xlane.xlu0 %972
  %v974 = vsel %vm105, %v970, 0.0
  %975 = vadd.xlane.f32.xlu0 %v974
  %v976 = vpop.xlane.xlu0 %975
  %v977 = vmul.f32 %v973, %v751
  %v978 = vmul.f32 %v976, %v751
  %v979 = vadd.f32 %v977, 1e-12
  %v980 = vadd.f32 %v978, 1e-12
  %v981 = vrsqrt.pop %v979
  %v982 = vmul.f32 %v981, %v979
  %v983 = vmul.f32 %v982, %v981
  %v984 = vmul.f32 0.5, %v983
  %v985 = vsub.f32 1.5, %v984
  %v986 = vmul.f32 %v981, %v985
  %vm987 = vweird.f32 %v979
  %vm988 = vweird.f32 %v981
  %vm989 = vmor %vm987, %vm988
  %v990 = vsel %vm989, %v981, %v986
  %v991 = vrsqrt.pop %v980
  %v992 = vmul.f32 %v991, %v980
  %v993 = vmul.f32 %v992, %v991
  %v994 = vmul.f32 0.5, %v993
  %v995 = vsub.f32 1.5, %v994
  %v996 = vmul.f32 %v991, %v995
  %vm997 = vweird.f32 %v980
  %vm998 = vweird.f32 %v991
  %vm999 = vmor %vm997, %vm998
  %v1000 = vsel %vm999, %v991, %v996
  %v1001 = vmul.f32 %v967, %v990
  %v1002 = vmul.f32 %v968, %v1000
  %v1004 = vperm.slane %v957, 0
  %v1006 = vmul.f32 %v1001, %v1004
  %v1007 = vmul.f32 %v1002, %v1004
  %v1009 = vperm.slane %v958, 0
  %v1011 = vadd.f32 %v1006, %v1009
  %v1012 = vadd.f32 %v1007, %v1009
  %1013 = vst.msk [vmem:[%s14] sm:$0xff] %vm105, %v1011
  %1014 = vst.msk [vmem:[%s14 + $0x8] sm:$0xff] %vm105, %v1012
  // Predicated region
  $region58: #{distilbert_class_forward.5} parent=0 // pred_check
    _
  $region59: #{distilbert_class_forward.5} parent=0 // pred_check_branch
    %1016 = sbr.rel (0) target = $region61
  $region60: #{distilbert_class_forward.5} parent=0 // pred_region
    _
  $region61: #{distilbert_class_forward.5} parent=0 // pred_fallthru
    _
  // Predicated region
  $region62: #{distilbert_class_forward.5} parent=0 // pred_check
    _
  $region63: #{distilbert_class_forward.5} parent=0 // pred_check_branch
    %1018 = sbr.rel (0) target = $region65
  $region64: #{distilbert_class_forward.5} parent=0 // pred_region
    _
  $region65: #{distilbert_class_forward.5} parent=0 // pred_fallthru
    _

</llo_original>
